<compile_context>
chip_gen: v6e
topology: v6e:2x2x1
jax: 0.10.0
libtpu: 0.0.40
codegen_flags: <defaults>
</compile_context>

<pallas_src>
import functools

import jax
import jax.numpy as jnp
from jax.experimental import pallas as pl
from jax.experimental.pallas import tpu as pltpu

EPS = 1e-5


def _finalize_bn(stats_ref, ss_ref, g_ref, b_ref, inv_n):
    """Fold accumulated (sum, sum_sq) into per-feature (scale, shift) — all f32."""
    mu = stats_ref[0:1, :] * inv_n
    var = stats_ref[1:2, :] * inv_n - mu * mu          # biased batch variance
    scale = g_ref[...] * jax.lax.rsqrt(var + EPS)      # EUP rsqrt
    ss_ref[0:1, :] = scale
    ss_ref[1:2, :] = b_ref[...] - mu * scale


def _matmul_and_stats(a_f32, w_ref, rows, act_ref, stats_ref):
    """h = a @ W (bf16 operands, f32 accumulation); stash h and accumulate BN stats."""
    h = jnp.dot(a_f32.astype(jnp.bfloat16), w_ref[...],
                preferred_element_type=jnp.float32)
    act_ref[rows, :] = h
    stats_ref[0:1, :] += jnp.sum(h, axis=0, keepdims=True)
    stats_ref[1:2, :] += jnp.sum(h * h, axis=0, keepdims=True)


def projection_mlp_kernel(x_ref,
                          w1_ref, w2_ref, w3_ref,
                          g1_ref, b1_ref, g2_ref, b2_ref, g3_ref, b3_ref,
                          o_ref,
                          act_ref, stats_ref, ss_ref,
                          *, batch, tile_n):
    p = pl.program_id(0)                 # phase (layer pass)
    i = pl.program_id(1)                 # batch tile
    inv_n = 1.0 / float(batch)

    row0 = pl.multiple_of(i * tile_n, tile_n)
    rows = pl.ds(row0, tile_n)

    # ---- Phase prologue (first batch tile of each phase) --------------------
    # Finalize the previous phase's BN stats into (scale, shift), then reset the
    # accumulator for the stats gathered during this phase.
    @pl.when(jnp.logical_and(i == 0, p == 1))
    def _():
        _finalize_bn(stats_ref, ss_ref, g1_ref, b1_ref, inv_n)

    @pl.when(jnp.logical_and(i == 0, p == 2))
    def _():
        _finalize_bn(stats_ref, ss_ref, g2_ref, b2_ref, inv_n)

    @pl.when(jnp.logical_and(i == 0, p == 3))
    def _():
        _finalize_bn(stats_ref, ss_ref, g3_ref, b3_ref, inv_n)

    @pl.when(i == 0)
    def _():
        stats_ref[...] = jnp.zeros_like(stats_ref)

    # ---- Per-tile work -------------------------------------------------------
    @pl.when(p == 0)
    def _():                              # h1 = x @ W1
        _matmul_and_stats(x_ref[...], w1_ref, rows, act_ref, stats_ref)

    @pl.when(p == 1)
    def _():                              # a1 = relu(bn1(h1)); h2 = a1 @ W2
        a = jnp.maximum(act_ref[rows, :] * ss_ref[0:1, :] + ss_ref[1:2, :], 0.0)
        _matmul_and_stats(a, w2_ref, rows, act_ref, stats_ref)

    @pl.when(p == 2)
    def _():                              # a2 = relu(bn2(h2)); h3 = a2 @ W3
        a = jnp.maximum(act_ref[rows, :] * ss_ref[0:1, :] + ss_ref[1:2, :], 0.0)
        _matmul_and_stats(a, w3_ref, rows, act_ref, stats_ref)

    @pl.when(p == 3)
    def _():                              # out = bn3(h3) (no ReLU)
        o_ref[...] = (act_ref[rows, :] * ss_ref[0:1, :]
                      + ss_ref[1:2, :]).astype(o_ref.dtype)


def _pick_batch_tile(n, max_tile=256):
    """Largest multiple-of-8 divisor of n that is <= max_tile (fallback: full batch)."""
    t = (min(n, max_tile) // 8) * 8
    while t >= 8:
        if n % t == 0:
            return t
        t -= 8
    return n


def projection_mlp(x, params, *, tile_n=None):
    """x: (N, input_dim) f32.  params: bf16 weights (in, out) + f32 gamma/beta (1, D)."""
    n, d_in = x.shape
    d_out = params["w1"].shape[1]
    if tile_n is None:
        tile_n = _pick_batch_tile(n)
    assert n % tile_n == 0, (n, tile_n)
    num_tiles = n // tile_n
    grid = (4, num_tiles)                 # (phase, batch tile)

    kernel = functools.partial(projection_mlp_kernel, batch=n, tile_n=tile_n)

    # Grid-invariant blocks: fetched into VMEM once and resident for the whole kernel.
    # (On VMEM-tight configs, e.g. v7x, add pipeline_mode=pl.Buffered(1) here.)
    def invariant(shape):
        return pl.BlockSpec(shape, lambda p, i: (0,) * len(shape))

    in_specs = [
        # x is only consumed in phase 0; later phases park on block 0 so no
        # redundant per-tile x DMAs are issued.
        pl.BlockSpec((tile_n, d_in), lambda p, i: (jnp.where(p == 0, i, 0), 0)),
        invariant(params["w1"].shape),
        invariant(params["w2"].shape),
        invariant(params["w3"].shape),
        invariant(params["g1"].shape), invariant(params["b1"].shape),
        invariant(params["g2"].shape), invariant(params["b2"].shape),
        invariant(params["g3"].shape), invariant(params["b3"].shape),
    ]
    # Output tiles are produced only in phase 3; freeze the block index at 0 until
    # then so only fully-computed tiles are ever written back to HBM.
    out_spec = pl.BlockSpec((tile_n, d_out),
                            lambda p, i: (jnp.where(p == 3, i, 0), 0))

    itemsize = lambda a: a.size * a.dtype.itemsize
    flops = 2 * n * (d_in * d_out + 2 * d_out * d_out) + 12 * n * d_out
    bytes_accessed = (itemsize(x) + sum(itemsize(v) for v in params.values())
                      + n * d_out * x.dtype.itemsize)

    return pl.pallas_call(
        kernel,
        out_shape=jax.ShapeDtypeStruct((n, d_out), x.dtype),
        grid=grid,
        in_specs=in_specs,
        out_specs=out_spec,
        scratch_shapes=[
            pltpu.VMEM((n, d_out), jnp.float32),   # full-batch pre-BN activations
            pltpu.VMEM((2, d_out), jnp.float32),   # per-feature [sum; sum of squares]
            pltpu.VMEM((2, d_out), jnp.float32),   # folded BN [scale; shift]
        ],
        compiler_params=pltpu.CompilerParams(
            # BN couples the whole batch through the scratch accumulators, so both
            # grid axes must run sequentially on one core.
            # TODO(synk): on v7x (2 TCs) add a leading "parallel" feature-split axis
            # (per-feature BN stats need no cross-core reduction) to use both cores.
            dimension_semantics=("arbitrary", "arbitrary"),
            vmem_limit_bytes=48 * 1024 * 1024,
        ),
        cost_estimate=pl.CostEstimate(
            flops=flops, transcendentals=3 * d_out, bytes_accessed=bytes_accessed),
    )(x,
      params["w1"], params["w2"], params["w3"],
      params["g1"], params["b1"],
      params["g2"], params["b2"],
      params["g3"], params["b3"])


def make_params(key, input_dim, output_dim):
    ks = jax.random.split(key, 9)

    def lin_init(k, fan_in, fan_out):
        # PyTorch-style uniform bound; stored (in, out) so the kernel computes x @ W.
        # bf16 storage: MXU consumes bf16 operands, accumulation stays f32.
        bound = 1.0 / (fan_in ** 0.5)
        w = jax.random.uniform(k, (fan_in, fan_out), jnp.float32, -bound, bound)
        return w.astype(jnp.bfloat16)

    def affine(kg, kb, d):
        g = 1.0 + 0.1 * jax.random.normal(kg, (1, d), jnp.float32)
        b = 0.1 * jax.random.normal(kb, (1, d), jnp.float32)
        return g, b

    g1, b1 = affine(ks[3], ks[4], output_dim)
    g2, b2 = affine(ks[5], ks[6], output_dim)
    g3, b3 = affine(ks[7], ks[8], output_dim)
    return {
        "w1": lin_init(ks[0], input_dim, output_dim), "g1": g1, "b1": b1,
        "w2": lin_init(ks[1], output_dim, output_dim), "g2": g2, "b2": b2,
        "w3": lin_init(ks[2], output_dim, output_dim), "g3": g3, "b3": b3,
    }


def projection_mlp_ref(x, p):
    """Pure-JAX reference mirroring the kernel numerics: bf16 matmul operands with
    f32 accumulation, training-mode BatchNorm (biased variance, eps=1e-5) in f32."""
    def bn(h, g, b):
        mu = jnp.mean(h, axis=0, keepdims=True)
        var = jnp.mean(h * h, axis=0, keepdims=True) - mu * mu
        scale = g * jax.lax.rsqrt(var + EPS)
        return h * scale + (b - mu * scale)

    def mm(a, w):
        return jnp.dot(a.astype(jnp.bfloat16), w, preferred_element_type=jnp.float32)

    h = jnp.maximum(bn(mm(x, p["w1"]), p["g1"], p["b1"]), 0.0)
    h = jnp.maximum(bn(mm(h, p["w2"]), p["g2"], p["b2"]), 0.0)
    return bn(mm(h, p["w3"]), p["g3"], p["b3"])


if __name__ == "__main__":
    key = jax.random.PRNGKey(0)
    kx, kp = jax.random.split(key)

    # Small but lane-dense (128) and sublane-aligned shapes.
    batch, input_dim, output_dim = 256, 128, 128
    x = jax.random.normal(kx, (batch, input_dim), jnp.float32)
    params = make_params(kp, input_dim, output_dim)

    out = jax.block_until_ready(projection_mlp(x, params, tile_n=64))
    ref = jax.block_until_ready(projection_mlp_ref(x, params))

    assert out.shape == (batch, output_dim)
    assert out.dtype == x.dtype
    # Kernel and reference share bf16 matmul operands / f32 BN, so they agree tightly.
    assert jnp.allclose(out, ref, atol=5e-3, rtol=5e-3), \
        float(jnp.max(jnp.abs(out - ref)))

    print("KERNEL_OK")
</pallas_src>

<mosaic_0001>
module attributes {stable_mosaic.version = 11 : i64} {
  func.func @projection_mlp_kernel(%arg0: i32, %arg1: i32, %arg2: memref<64x128xf32, #tpu.memory_space<vmem>>, %arg3: memref<128x128xbf16, #tpu.memory_space<vmem>>, %arg4: memref<128x128xbf16, #tpu.memory_space<vmem>>, %arg5: memref<128x128xbf16, #tpu.memory_space<vmem>>, %arg6: memref<1x128xf32, #tpu.memory_space<vmem>>, %arg7: memref<1x128xf32, #tpu.memory_space<vmem>>, %arg8: memref<1x128xf32, #tpu.memory_space<vmem>>, %arg9: memref<1x128xf32, #tpu.memory_space<vmem>>, %arg10: memref<1x128xf32, #tpu.memory_space<vmem>>, %arg11: memref<1x128xf32, #tpu.memory_space<vmem>>, %arg12: memref<64x128xf32, #tpu.memory_space<vmem>>, %arg13: memref<256x128xf32, #tpu.memory_space<vmem>>, %arg14: memref<2x128xf32, #tpu.memory_space<vmem>>, %arg15: memref<2x128xf32, #tpu.memory_space<vmem>>) attributes {dimension_semantics = [#tpu.dimension_semantics<arbitrary>, #tpu.dimension_semantics<arbitrary>], iteration_bounds = array<i64: 4, 4>, scalar_prefetch = 0 : i64, scratch_operands = 3 : i64, tpu.core_type = #tpu.core_type<tc>, window_params = [{transform_indices = @transform_0, window_bounds = array<i64: 64, 128>}, {pipeline_mode = #tpu.pipeline_mode<synchronous>, transform_indices = @transform_1, window_bounds = array<i64: 128, 128>}, {pipeline_mode = #tpu.pipeline_mode<synchronous>, transform_indices = @transform_2, window_bounds = array<i64: 128, 128>}, {pipeline_mode = #tpu.pipeline_mode<synchronous>, transform_indices = @transform_3, window_bounds = array<i64: 128, 128>}, {pipeline_mode = #tpu.pipeline_mode<synchronous>, transform_indices = @transform_4, window_bounds = array<i64: 1, 128>}, {pipeline_mode = #tpu.pipeline_mode<synchronous>, transform_indices = @transform_5, window_bounds = array<i64: 1, 128>}, {pipeline_mode = #tpu.pipeline_mode<synchronous>, transform_indices = @transform_6, window_bounds = array<i64: 1, 128>}, {pipeline_mode = #tpu.pipeline_mode<synchronous>, transform_indices = @transform_7, window_bounds = array<i64: 1, 128>}, {pipeline_mode = #tpu.pipeline_mode<synchronous>, transform_indices = @transform_8, window_bounds = array<i64: 1, 128>}, {pipeline_mode = #tpu.pipeline_mode<synchronous>, transform_indices = @transform_9, window_bounds = array<i64: 1, 128>}, {transform_indices = @transform_10, window_bounds = array<i64: 64, 128>}]} {
    %c64_i32 = arith.constant 64 : i32
    %0 = arith.muli %arg1, %c64_i32 : i32
    %1 = tpu.assume_multiple %0, 64 : i32
    %c0_i32 = arith.constant 0 : i32
    %2 = arith.cmpi eq, %arg1, %c0_i32 : i32
    %c1_i32 = arith.constant 1 : i32
    %3 = arith.cmpi eq, %arg0, %c1_i32 : i32
    %4 = arith.andi %2, %3 : i1
    %5 = arith.extui %4 : i1 to i32
    %c0_i32_0 = arith.constant 0 : i32
    %6 = arith.cmpi ne, %5, %c0_i32_0 : i32
    scf.if %6 {
      %c0 = arith.constant 0 : index
      %c0_15 = arith.constant 0 : index
      %32 = vector.load %arg14[%c0, %c0_15] : memref<2x128xf32, #tpu.memory_space<vmem>>, vector<1x128xf32>
      %cst = arith.constant 3.906250e-03 : f32
      %33 = vector.broadcast %cst : f32 to vector<1x128xf32>
      %34 = arith.mulf %32, %33 : vector<1x128xf32>
      %c1 = arith.constant 1 : index
      %c0_16 = arith.constant 0 : index
      %35 = vector.load %arg14[%c1, %c0_16] : memref<2x128xf32, #tpu.memory_space<vmem>>, vector<1x128xf32>
      %cst_17 = arith.constant 3.906250e-03 : f32
      %36 = vector.broadcast %cst_17 : f32 to vector<1x128xf32>
      %37 = arith.mulf %35, %36 : vector<1x128xf32>
      %38 = arith.mulf %34, %34 : vector<1x128xf32>
      %39 = arith.subf %37, %38 : vector<1x128xf32>
      %c0_18 = arith.constant 0 : index
      %c0_19 = arith.constant 0 : index
      %40 = vector.load %arg6[%c0_18, %c0_19] : memref<1x128xf32, #tpu.memory_space<vmem>>, vector<1x128xf32>
      %cst_20 = arith.constant 9.99999974E-6 : f32
      %41 = vector.broadcast %cst_20 : f32 to vector<1x128xf32>
      %42 = arith.addf %39, %41 : vector<1x128xf32>
      %43 = math.rsqrt %42 : vector<1x128xf32>
      %44 = arith.mulf %40, %43 : vector<1x128xf32>
      %c0_21 = arith.constant 0 : index
      %c0_22 = arith.constant 0 : index
      %45 = vector.load %arg15[%c0_21, %c0_22] : memref<2x128xf32, #tpu.memory_space<vmem>>, vector<1x128xf32>
      tpu.vector_store %arg15[%c0_21, %c0_22], %44 {strides = array<i32>} : memref<2x128xf32, #tpu.memory_space<vmem>>, vector<1x128xf32>,
      %c0_23 = arith.constant 0 : index
      %c0_24 = arith.constant 0 : index
      %46 = vector.load %arg7[%c0_23, %c0_24] : memref<1x128xf32, #tpu.memory_space<vmem>>, vector<1x128xf32>
      %47 = arith.mulf %34, %44 : vector<1x128xf32>
      %48 = arith.subf %46, %47 : vector<1x128xf32>
      %c1_25 = arith.constant 1 : index
      %c0_26 = arith.constant 0 : index
      %49 = vector.load %arg15[%c1_25, %c0_26] : memref<2x128xf32, #tpu.memory_space<vmem>>, vector<1x128xf32>
      tpu.vector_store %arg15[%c1_25, %c0_26], %48 {strides = array<i32>} : memref<2x128xf32, #tpu.memory_space<vmem>>, vector<1x128xf32>,
    } else {
    }
    %c0_i32_1 = arith.constant 0 : i32
    %7 = arith.cmpi eq, %arg1, %c0_i32_1 : i32
    %c2_i32 = arith.constant 2 : i32
    %8 = arith.cmpi eq, %arg0, %c2_i32 : i32
    %9 = arith.andi %7, %8 : i1
    %10 = arith.extui %9 : i1 to i32
    %c0_i32_2 = arith.constant 0 : i32
    %11 = arith.cmpi ne, %10, %c0_i32_2 : i32
    scf.if %11 {
      %c0 = arith.constant 0 : index
      %c0_15 = arith.constant 0 : index
      %32 = vector.load %arg14[%c0, %c0_15] : memref<2x128xf32, #tpu.memory_space<vmem>>, vector<1x128xf32>
      %cst = arith.constant 3.906250e-03 : f32
      %33 = vector.broadcast %cst : f32 to vector<1x128xf32>
      %34 = arith.mulf %32, %33 : vector<1x128xf32>
      %c1 = arith.constant 1 : index
      %c0_16 = arith.constant 0 : index
      %35 = vector.load %arg14[%c1, %c0_16] : memref<2x128xf32, #tpu.memory_space<vmem>>, vector<1x128xf32>
      %cst_17 = arith.constant 3.906250e-03 : f32
      %36 = vector.broadcast %cst_17 : f32 to vector<1x128xf32>
      %37 = arith.mulf %35, %36 : vector<1x128xf32>
      %38 = arith.mulf %34, %34 : vector<1x128xf32>
      %39 = arith.subf %37, %38 : vector<1x128xf32>
      %c0_18 = arith.constant 0 : index
      %c0_19 = arith.constant 0 : index
      %40 = vector.load %arg8[%c0_18, %c0_19] : memref<1x128xf32, #tpu.memory_space<vmem>>, vector<1x128xf32>
      %cst_20 = arith.constant 9.99999974E-6 : f32
      %41 = vector.broadcast %cst_20 : f32 to vector<1x128xf32>
      %42 = arith.addf %39, %41 : vector<1x128xf32>
      %43 = math.rsqrt %42 : vector<1x128xf32>
      %44 = arith.mulf %40, %43 : vector<1x128xf32>
      %c0_21 = arith.constant 0 : index
      %c0_22 = arith.constant 0 : index
      %45 = vector.load %arg15[%c0_21, %c0_22] : memref<2x128xf32, #tpu.memory_space<vmem>>, vector<1x128xf32>
      tpu.vector_store %arg15[%c0_21, %c0_22], %44 {strides = array<i32>} : memref<2x128xf32, #tpu.memory_space<vmem>>, vector<1x128xf32>,
      %c0_23 = arith.constant 0 : index
      %c0_24 = arith.constant 0 : index
      %46 = vector.load %arg9[%c0_23, %c0_24] : memref<1x128xf32, #tpu.memory_space<vmem>>, vector<1x128xf32>
      %47 = arith.mulf %34, %44 : vector<1x128xf32>
      %48 = arith.subf %46, %47 : vector<1x128xf32>
      %c1_25 = arith.constant 1 : index
      %c0_26 = arith.constant 0 : index
      %49 = vector.load %arg15[%c1_25, %c0_26] : memref<2x128xf32, #tpu.memory_space<vmem>>, vector<1x128xf32>
      tpu.vector_store %arg15[%c1_25, %c0_26], %48 {strides = array<i32>} : memref<2x128xf32, #tpu.memory_space<vmem>>, vector<1x128xf32>,
    } else {
    }
    %c0_i32_3 = arith.constant 0 : i32
    %12 = arith.cmpi eq, %arg1, %c0_i32_3 : i32
    %c3_i32 = arith.constant 3 : i32
    %13 = arith.cmpi eq, %arg0, %c3_i32 : i32
    %14 = arith.andi %12, %13 : i1
    %15 = arith.extui %14 : i1 to i32
    %c0_i32_4 = arith.constant 0 : i32
    %16 = arith.cmpi ne, %15, %c0_i32_4 : i32
    scf.if %16 {
      %c0 = arith.constant 0 : index
      %c0_15 = arith.constant 0 : index
      %32 = vector.load %arg14[%c0, %c0_15] : memref<2x128xf32, #tpu.memory_space<vmem>>, vector<1x128xf32>
      %cst = arith.constant 3.906250e-03 : f32
      %33 = vector.broadcast %cst : f32 to vector<1x128xf32>
      %34 = arith.mulf %32, %33 : vector<1x128xf32>
      %c1 = arith.constant 1 : index
      %c0_16 = arith.constant 0 : index
      %35 = vector.load %arg14[%c1, %c0_16] : memref<2x128xf32, #tpu.memory_space<vmem>>, vector<1x128xf32>
      %cst_17 = arith.constant 3.906250e-03 : f32
      %36 = vector.broadcast %cst_17 : f32 to vector<1x128xf32>
      %37 = arith.mulf %35, %36 : vector<1x128xf32>
      %38 = arith.mulf %34, %34 : vector<1x128xf32>
      %39 = arith.subf %37, %38 : vector<1x128xf32>
      %c0_18 = arith.constant 0 : index
      %c0_19 = arith.constant 0 : index
      %40 = vector.load %arg10[%c0_18, %c0_19] : memref<1x128xf32, #tpu.memory_space<vmem>>, vector<1x128xf32>
      %cst_20 = arith.constant 9.99999974E-6 : f32
      %41 = vector.broadcast %cst_20 : f32 to vector<1x128xf32>
      %42 = arith.addf %39, %41 : vector<1x128xf32>
      %43 = math.rsqrt %42 : vector<1x128xf32>
      %44 = arith.mulf %40, %43 : vector<1x128xf32>
      %c0_21 = arith.constant 0 : index
      %c0_22 = arith.constant 0 : index
      %45 = vector.load %arg15[%c0_21, %c0_22] : memref<2x128xf32, #tpu.memory_space<vmem>>, vector<1x128xf32>
      tpu.vector_store %arg15[%c0_21, %c0_22], %44 {strides = array<i32>} : memref<2x128xf32, #tpu.memory_space<vmem>>, vector<1x128xf32>,
      %c0_23 = arith.constant 0 : index
      %c0_24 = arith.constant 0 : index
      %46 = vector.load %arg11[%c0_23, %c0_24] : memref<1x128xf32, #tpu.memory_space<vmem>>, vector<1x128xf32>
      %47 = arith.mulf %34, %44 : vector<1x128xf32>
      %48 = arith.subf %46, %47 : vector<1x128xf32>
      %c1_25 = arith.constant 1 : index
      %c0_26 = arith.constant 0 : index
      %49 = vector.load %arg15[%c1_25, %c0_26] : memref<2x128xf32, #tpu.memory_space<vmem>>, vector<1x128xf32>
      tpu.vector_store %arg15[%c1_25, %c0_26], %48 {strides = array<i32>} : memref<2x128xf32, #tpu.memory_space<vmem>>, vector<1x128xf32>,
    } else {
    }
    %c0_i32_5 = arith.constant 0 : i32
    %17 = arith.cmpi eq, %arg1, %c0_i32_5 : i32
    %18 = arith.extui %17 : i1 to i32
    %c0_i32_6 = arith.constant 0 : i32
    %19 = arith.cmpi ne, %18, %c0_i32_6 : i32
    scf.if %19 {
      %cst = arith.constant 0.000000e+00 : f32
      %32 = vector.broadcast %cst : f32 to vector<2x128xf32>
      %c0 = arith.constant 0 : index
      %c0_15 = arith.constant 0 : index
      %33 = vector.load %arg14[%c0, %c0_15] : memref<2x128xf32, #tpu.memory_space<vmem>>, vector<2x128xf32>
      tpu.vector_store %arg14[%c0, %c0_15], %32 {strides = array<i32>} : memref<2x128xf32, #tpu.memory_space<vmem>>, vector<2x128xf32>,
    } else {
    }
    %c0_i32_7 = arith.constant 0 : i32
    %20 = arith.cmpi eq, %arg0, %c0_i32_7 : i32
    %21 = arith.extui %20 : i1 to i32
    %c0_i32_8 = arith.constant 0 : i32
    %22 = arith.cmpi ne, %21, %c0_i32_8 : i32
    scf.if %22 {
      %c0 = arith.constant 0 : index
      %c0_15 = arith.constant 0 : index
      %32 = vector.load %arg2[%c0, %c0_15] : memref<64x128xf32, #tpu.memory_space<vmem>>, vector<64x128xf32>
      %33 = arith.truncf %32 : vector<64x128xf32> to vector<64x128xbf16>
      %c0_16 = arith.constant 0 : index
      %c0_17 = arith.constant 0 : index
      %34 = vector.load %arg3[%c0_16, %c0_17] : memref<128x128xbf16, #tpu.memory_space<vmem>>, vector<128x128xbf16>
      %cst = arith.constant dense<0.000000e+00> : vector<64x128xf32>
      %35 = tpu.matmul %33, %34, %cst {dimension_numbers = #tpu.dot_dimension_numbers<[1], [0], [0], [1], [0, 0, 1, 1], [], []>} : vector<64x128xbf16>, vector<128x128xbf16>, vector<64x128xf32> -> vector<64x128xf32>
      %36 = arith.index_cast %1 : i32 to index
      %c0_18 = arith.constant 0 : index
      %37 = vector.load %arg13[%36, %c0_18] : memref<256x128xf32, #tpu.memory_space<vmem>>, vector<64x128xf32>
      tpu.vector_store %arg13[%36, %c0_18], %35 {strides = array<i32>} : memref<256x128xf32, #tpu.memory_space<vmem>>, vector<64x128xf32>,
      %c0_19 = arith.constant 0 : index
      %c0_20 = arith.constant 0 : index
      %38 = vector.load %arg14[%c0_19, %c0_20] : memref<2x128xf32, #tpu.memory_space<vmem>>, vector<1x128xf32>
      %cst_21 = arith.constant dense<0.000000e+00> : vector<128xf32>
      %39 = vector.multi_reduction <add>, %35, %cst_21 [0] : vector<64x128xf32> to vector<128xf32>
      %40 = vector.shape_cast %39 : vector<128xf32> to vector<1x128xf32>
      %41 = arith.addf %38, %40 : vector<1x128xf32>
      %c0_22 = arith.constant 0 : index
      %c0_23 = arith.constant 0 : index
      %42 = vector.load %arg14[%c0_22, %c0_23] : memref<2x128xf32, #tpu.memory_space<vmem>>, vector<1x128xf32>
      tpu.vector_store %arg14[%c0_22, %c0_23], %41 {strides = array<i32>} : memref<2x128xf32, #tpu.memory_space<vmem>>, vector<1x128xf32>,
      %c1 = arith.constant 1 : index
      %c0_24 = arith.constant 0 : index
      %43 = vector.load %arg14[%c1, %c0_24] : memref<2x128xf32, #tpu.memory_space<vmem>>, vector<1x128xf32>
      %44 = arith.mulf %35, %35 : vector<64x128xf32>
      %cst_25 = arith.constant dense<0.000000e+00> : vector<128xf32>
      %45 = vector.multi_reduction <add>, %44, %cst_25 [0] : vector<64x128xf32> to vector<128xf32>
      %46 = vector.shape_cast %45 : vector<128xf32> to vector<1x128xf32>
      %47 = arith.addf %43, %46 : vector<1x128xf32>
      %c1_26 = arith.constant 1 : index
      %c0_27 = arith.constant 0 : index
      %48 = vector.load %arg14[%c1_26, %c0_27] : memref<2x128xf32, #tpu.memory_space<vmem>>, vector<1x128xf32>
      tpu.vector_store %arg14[%c1_26, %c0_27], %47 {strides = array<i32>} : memref<2x128xf32, #tpu.memory_space<vmem>>, vector<1x128xf32>,
    } else {
    }
    %c1_i32_9 = arith.constant 1 : i32
    %23 = arith.cmpi eq, %arg0, %c1_i32_9 : i32
    %24 = arith.extui %23 : i1 to i32
    %c0_i32_10 = arith.constant 0 : i32
    %25 = arith.cmpi ne, %24, %c0_i32_10 : i32
    scf.if %25 {
      %32 = arith.index_cast %1 : i32 to index
      %c0 = arith.constant 0 : index
      %33 = vector.load %arg13[%32, %c0] : memref<256x128xf32, #tpu.memory_space<vmem>>, vector<64x128xf32>
      %c0_15 = arith.constant 0 : index
      %c0_16 = arith.constant 0 : index
      %34 = vector.load %arg15[%c0_15, %c0_16] : memref<2x128xf32, #tpu.memory_space<vmem>>, vector<1x128xf32>
      %35 = vector.broadcast %34 : vector<1x128xf32> to vector<64x128xf32>
      %36 = arith.mulf %33, %35 : vector<64x128xf32>
      %c1 = arith.constant 1 : index
      %c0_17 = arith.constant 0 : index
      %37 = vector.load %arg15[%c1, %c0_17] : memref<2x128xf32, #tpu.memory_space<vmem>>, vector<1x128xf32>
      %38 = vector.broadcast %37 : vector<1x128xf32> to vector<64x128xf32>
      %39 = arith.addf %36, %38 : vector<64x128xf32>
      %cst = arith.constant 0.000000e+00 : f32
      %40 = vector.broadcast %cst : f32 to vector<64x128xf32>
      %41 = arith.maximumf %39, %40 : vector<64x128xf32>
      %42 = arith.truncf %41 : vector<64x128xf32> to vector<64x128xbf16>
      %c0_18 = arith.constant 0 : index
      %c0_19 = arith.constant 0 : index
      %43 = vector.load %arg4[%c0_18, %c0_19] : memref<128x128xbf16, #tpu.memory_space<vmem>>, vector<128x128xbf16>
      %cst_20 = arith.constant dense<0.000000e+00> : vector<64x128xf32>
      %44 = tpu.matmul %42, %43, %cst_20 {dimension_numbers = #tpu.dot_dimension_numbers<[1], [0], [0], [1], [0, 0, 1, 1], [], []>} : vector<64x128xbf16>, vector<128x128xbf16>, vector<64x128xf32> -> vector<64x128xf32>
      %45 = arith.index_cast %1 : i32 to index
      %c0_21 = arith.constant 0 : index
      %46 = vector.load %arg13[%45, %c0_21] : memref<256x128xf32, #tpu.memory_space<vmem>>, vector<64x128xf32>
      tpu.vector_store %arg13[%45, %c0_21], %44 {strides = array<i32>} : memref<256x128xf32, #tpu.memory_space<vmem>>, vector<64x128xf32>,
      %c0_22 = arith.constant 0 : index
      %c0_23 = arith.constant 0 : index
      %47 = vector.load %arg14[%c0_22, %c0_23] : memref<2x128xf32, #tpu.memory_space<vmem>>, vector<1x128xf32>
      %cst_24 = arith.constant dense<0.000000e+00> : vector<128xf32>
      %48 = vector.multi_reduction <add>, %44, %cst_24 [0] : vector<64x128xf32> to vector<128xf32>
      %49 = vector.shape_cast %48 : vector<128xf32> to vector<1x128xf32>
      %50 = arith.addf %47, %49 : vector<1x128xf32>
      %c0_25 = arith.constant 0 : index
      %c0_26 = arith.constant 0 : index
      %51 = vector.load %arg14[%c0_25, %c0_26] : memref<2x128xf32, #tpu.memory_space<vmem>>, vector<1x128xf32>
      tpu.vector_store %arg14[%c0_25, %c0_26], %50 {strides = array<i32>} : memref<2x128xf32, #tpu.memory_space<vmem>>, vector<1x128xf32>,
      %c1_27 = arith.constant 1 : index
      %c0_28 = arith.constant 0 : index
      %52 = vector.load %arg14[%c1_27, %c0_28] : memref<2x128xf32, #tpu.memory_space<vmem>>, vector<1x128xf32>
      %53 = arith.mulf %44, %44 : vector<64x128xf32>
      %cst_29 = arith.constant dense<0.000000e+00> : vector<128xf32>
      %54 = vector.multi_reduction <add>, %53, %cst_29 [0] : vector<64x128xf32> to vector<128xf32>
      %55 = vector.shape_cast %54 : vector<128xf32> to vector<1x128xf32>
      %56 = arith.addf %52, %55 : vector<1x128xf32>
      %c1_30 = arith.constant 1 : index
      %c0_31 = arith.constant 0 : index
      %57 = vector.load %arg14[%c1_30, %c0_31] : memref<2x128xf32, #tpu.memory_space<vmem>>, vector<1x128xf32>
      tpu.vector_store %arg14[%c1_30, %c0_31], %56 {strides = array<i32>} : memref<2x128xf32, #tpu.memory_space<vmem>>, vector<1x128xf32>,
    } else {
    }
    %c2_i32_11 = arith.constant 2 : i32
    %26 = arith.cmpi eq, %arg0, %c2_i32_11 : i32
    %27 = arith.extui %26 : i1 to i32
    %c0_i32_12 = arith.constant 0 : i32
    %28 = arith.cmpi ne, %27, %c0_i32_12 : i32
    scf.if %28 {
      %32 = arith.index_cast %1 : i32 to index
      %c0 = arith.constant 0 : index
      %33 = vector.load %arg13[%32, %c0] : memref<256x128xf32, #tpu.memory_space<vmem>>, vector<64x128xf32>
      %c0_15 = arith.constant 0 : index
      %c0_16 = arith.constant 0 : index
      %34 = vector.load %arg15[%c0_15, %c0_16] : memref<2x128xf32, #tpu.memory_space<vmem>>, vector<1x128xf32>
      %35 = vector.broadcast %34 : vector<1x128xf32> to vector<64x128xf32>
      %36 = arith.mulf %33, %35 : vector<64x128xf32>
      %c1 = arith.constant 1 : index
      %c0_17 = arith.constant 0 : index
      %37 = vector.load %arg15[%c1, %c0_17] : memref<2x128xf32, #tpu.memory_space<vmem>>, vector<1x128xf32>
      %38 = vector.broadcast %37 : vector<1x128xf32> to vector<64x128xf32>
      %39 = arith.addf %36, %38 : vector<64x128xf32>
      %cst = arith.constant 0.000000e+00 : f32
      %40 = vector.broadcast %cst : f32 to vector<64x128xf32>
      %41 = arith.maximumf %39, %40 : vector<64x128xf32>
      %42 = arith.truncf %41 : vector<64x128xf32> to vector<64x128xbf16>
      %c0_18 = arith.constant 0 : index
      %c0_19 = arith.constant 0 : index
      %43 = vector.load %arg5[%c0_18, %c0_19] : memref<128x128xbf16, #tpu.memory_space<vmem>>, vector<128x128xbf16>
      %cst_20 = arith.constant dense<0.000000e+00> : vector<64x128xf32>
      %44 = tpu.matmul %42, %43, %cst_20 {dimension_numbers = #tpu.dot_dimension_numbers<[1], [0], [0], [1], [0, 0, 1, 1], [], []>} : vector<64x128xbf16>, vector<128x128xbf16>, vector<64x128xf32> -> vector<64x128xf32>
      %45 = arith.index_cast %1 : i32 to index
      %c0_21 = arith.constant 0 : index
      %46 = vector.load %arg13[%45, %c0_21] : memref<256x128xf32, #tpu.memory_space<vmem>>, vector<64x128xf32>
      tpu.vector_store %arg13[%45, %c0_21], %44 {strides = array<i32>} : memref<256x128xf32, #tpu.memory_space<vmem>>, vector<64x128xf32>,
      %c0_22 = arith.constant 0 : index
      %c0_23 = arith.constant 0 : index
      %47 = vector.load %arg14[%c0_22, %c0_23] : memref<2x128xf32, #tpu.memory_space<vmem>>, vector<1x128xf32>
      %cst_24 = arith.constant dense<0.000000e+00> : vector<128xf32>
      %48 = vector.multi_reduction <add>, %44, %cst_24 [0] : vector<64x128xf32> to vector<128xf32>
      %49 = vector.shape_cast %48 : vector<128xf32> to vector<1x128xf32>
      %50 = arith.addf %47, %49 : vector<1x128xf32>
      %c0_25 = arith.constant 0 : index
      %c0_26 = arith.constant 0 : index
      %51 = vector.load %arg14[%c0_25, %c0_26] : memref<2x128xf32, #tpu.memory_space<vmem>>, vector<1x128xf32>
      tpu.vector_store %arg14[%c0_25, %c0_26], %50 {strides = array<i32>} : memref<2x128xf32, #tpu.memory_space<vmem>>, vector<1x128xf32>,
      %c1_27 = arith.constant 1 : index
      %c0_28 = arith.constant 0 : index
      %52 = vector.load %arg14[%c1_27, %c0_28] : memref<2x128xf32, #tpu.memory_space<vmem>>, vector<1x128xf32>
      %53 = arith.mulf %44, %44 : vector<64x128xf32>
      %cst_29 = arith.constant dense<0.000000e+00> : vector<128xf32>
      %54 = vector.multi_reduction <add>, %53, %cst_29 [0] : vector<64x128xf32> to vector<128xf32>
      %55 = vector.shape_cast %54 : vector<128xf32> to vector<1x128xf32>
      %56 = arith.addf %52, %55 : vector<1x128xf32>
      %c1_30 = arith.constant 1 : index
      %c0_31 = arith.constant 0 : index
      %57 = vector.load %arg14[%c1_30, %c0_31] : memref<2x128xf32, #tpu.memory_space<vmem>>, vector<1x128xf32>
      tpu.vector_store %arg14[%c1_30, %c0_31], %56 {strides = array<i32>} : memref<2x128xf32, #tpu.memory_space<vmem>>, vector<1x128xf32>,
    } else {
    }
    %c3_i32_13 = arith.constant 3 : i32
    %29 = arith.cmpi eq, %arg0, %c3_i32_13 : i32
    %30 = arith.extui %29 : i1 to i32
    %c0_i32_14 = arith.constant 0 : i32
    %31 = arith.cmpi ne, %30, %c0_i32_14 : i32
    scf.if %31 {
      %32 = arith.index_cast %1 : i32 to index
      %c0 = arith.constant 0 : index
      %33 = vector.load %arg13[%32, %c0] : memref<256x128xf32, #tpu.memory_space<vmem>>, vector<64x128xf32>
      %c0_15 = arith.constant 0 : index
      %c0_16 = arith.constant 0 : index
      %34 = vector.load %arg15[%c0_15, %c0_16] : memref<2x128xf32, #tpu.memory_space<vmem>>, vector<1x128xf32>
      %35 = vector.broadcast %34 : vector<1x128xf32> to vector<64x128xf32>
      %36 = arith.mulf %33, %35 : vector<64x128xf32>
      %c1 = arith.constant 1 : index
      %c0_17 = arith.constant 0 : index
      %37 = vector.load %arg15[%c1, %c0_17] : memref<2x128xf32, #tpu.memory_space<vmem>>, vector<1x128xf32>
      %38 = vector.broadcast %37 : vector<1x128xf32> to vector<64x128xf32>
      %39 = arith.addf %36, %38 : vector<64x128xf32>
      %c0_18 = arith.constant 0 : index
      %c0_19 = arith.constant 0 : index
      %40 = vector.load %arg12[%c0_18, %c0_19] : memref<64x128xf32, #tpu.memory_space<vmem>>, vector<64x128xf32>
      tpu.vector_store %arg12[%c0_18, %c0_19], %39 {strides = array<i32>} : memref<64x128xf32, #tpu.memory_space<vmem>>, vector<64x128xf32>,
    } else {
    }
    return
  }
  func.func @transform_0(%arg0: i32, %arg1: i32) -> (i32, i32) {
    %c0_i32 = arith.constant 0 : i32
    %0 = arith.cmpi eq, %arg0, %c0_i32 : i32
    %c0_i32_0 = arith.constant 0 : i32
    %1 = arith.select %0, %arg1, %c0_i32_0 : i32
    %c0_i32_1 = arith.constant 0 : i32
    %c0_i32_2 = arith.constant 0 : i32
    return %1, %c0_i32_1 : i32, i32
  }
  func.func @transform_1(%arg0: i32, %arg1: i32) -> (i32, i32) {
    %c0_i32 = arith.constant 0 : i32
    %c0_i32_0 = arith.constant 0 : i32
    %c0_i32_1 = arith.constant 0 : i32
    return %c0_i32, %c0_i32_0 : i32, i32
  }
  func.func @transform_2(%arg0: i32, %arg1: i32) -> (i32, i32) {
    %c0_i32 = arith.constant 0 : i32
    %c0_i32_0 = arith.constant 0 : i32
    %c0_i32_1 = arith.constant 0 : i32
    return %c0_i32, %c0_i32_0 : i32, i32
  }
  func.func @transform_3(%arg0: i32, %arg1: i32) -> (i32, i32) {
    %c0_i32 = arith.constant 0 : i32
    %c0_i32_0 = arith.constant 0 : i32
    %c0_i32_1 = arith.constant 0 : i32
    return %c0_i32, %c0_i32_0 : i32, i32
  }
  func.func @transform_4(%arg0: i32, %arg1: i32) -> (i32, i32) {
    %c0_i32 = arith.constant 0 : i32
    %c0_i32_0 = arith.constant 0 : i32
    %c0_i32_1 = arith.constant 0 : i32
    return %c0_i32, %c0_i32_0 : i32, i32
  }
  func.func @transform_5(%arg0: i32, %arg1: i32) -> (i32, i32) {
    %c0_i32 = arith.constant 0 : i32
    %c0_i32_0 = arith.constant 0 : i32
    %c0_i32_1 = arith.constant 0 : i32
    return %c0_i32, %c0_i32_0 : i32, i32
  }
  func.func @transform_6(%arg0: i32, %arg1: i32) -> (i32, i32) {
    %c0_i32 = arith.constant 0 : i32
    %c0_i32_0 = arith.constant 0 : i32
    %c0_i32_1 = arith.constant 0 : i32
    return %c0_i32, %c0_i32_0 : i32, i32
  }
  func.func @transform_7(%arg0: i32, %arg1: i32) -> (i32, i32) {
    %c0_i32 = arith.constant 0 : i32
    %c0_i32_0 = arith.constant 0 : i32
    %c0_i32_1 = arith.constant 0 : i32
    return %c0_i32, %c0_i32_0 : i32, i32
  }
  func.func @transform_8(%arg0: i32, %arg1: i32) -> (i32, i32) {
    %c0_i32 = arith.constant 0 : i32
    %c0_i32_0 = arith.constant 0 : i32
    %c0_i32_1 = arith.constant 0 : i32
    return %c0_i32, %c0_i32_0 : i32, i32
  }
  func.func @transform_9(%arg0: i32, %arg1: i32) -> (i32, i32) {
    %c0_i32 = arith.constant 0 : i32
    %c0_i32_0 = arith.constant 0 : i32
    %c0_i32_1 = arith.constant 0 : i32
    return %c0_i32, %c0_i32_0 : i32, i32
  }
  func.func @transform_10(%arg0: i32, %arg1: i32) -> (i32, i32) {
    %c3_i32 = arith.constant 3 : i32
    %0 = arith.cmpi eq, %arg0, %c3_i32 : i32
    %c0_i32 = arith.constant 0 : i32
    %1 = arith.select %0, %arg1, %c0_i32 : i32
    %c0_i32_0 = arith.constant 0 : i32
    %c0_i32_1 = arith.constant 0 : i32
    return %1, %c0_i32_0 : i32, i32
  }
}

</mosaic_0001>

<llo_original>
// kernel: tpu_custom_call.1
$region0: #{tpu_custom_call.1}
  #allocation0 [shape = 'u32[]', space=smem, size = 0x4, offset = 0x4, fixed_abs, tag = 'smem constant byte address 0x4 - core index']
  #allocation1 [shape = 'u32[144,128]{1,0:T(1,128)}', space=vmem, size = 0x12000, scoped, tag = 'internal scratch']
  #allocation2 [shape = 'f32[256,128]{1,0:T(8,128)}', space=vmem, size = 0x20000, scoped, tag = 'scratch operand']
  #allocation3 [shape = 'f32[2,128]{1,0:T(2,128)}', space=vmem, size = 0x400, scoped, tag = 'scratch operand']
  #allocation4 [shape = 'f32[2,128]{1,0:T(2,128)}', space=vmem, size = 0x400, scoped, tag = 'scratch operand']
  %s0 = inlined_call_operand.hbm [shape: f32[256,128], index: 0, kind: input, shape index: {}]
  %s1 = inlined_call_operand.hbm [shape: bf16[128,128], index: 1, kind: input, shape index: {}]
  %s2 = inlined_call_operand.hbm [shape: bf16[128,128], index: 2, kind: input, shape index: {}]
  %s3 = inlined_call_operand.hbm [shape: bf16[128,128], index: 3, kind: input, shape index: {}]
  %s4 = inlined_call_operand.vmem [shape: f32[1,128], index: 4, kind: input, shape index: {}]
  %s5 = inlined_call_operand.vmem [shape: f32[1,128], index: 5, kind: input, shape index: {}]
  %s6 = inlined_call_operand.vmem [shape: f32[1,128], index: 6, kind: input, shape index: {}]
  %s7 = inlined_call_operand.vmem [shape: f32[1,128], index: 7, kind: input, shape index: {}]
  %s8 = inlined_call_operand.vmem [shape: f32[1,128], index: 8, kind: input, shape index: {}]
  %s9 = inlined_call_operand.vmem [shape: f32[1,128], index: 9, kind: input, shape index: {}]
  %s10 = inlined_call_operand.hbm [shape: f32[256,128], index: 10, kind: output, shape index: {}]
  %s11 = sld [smem:[#allocation0]]
  $region121: #{tpu_custom_call.1} parent=0
    _
  %s13 = ssub.s32 1, %s11
  %s14 = scalar_select 0, %s13, %s11
  $region1: #{tpu_custom_call.1} parent=0
    #allocation5 [shape = 'u8[65536]{0}', space=vmem, size = 0x10000, scoped, tag = 'input window, operand 0']
    #allocation6 [shape = 's32[2]{0}', space=sflag, size = 0x8, scoped, tag = 'scoped memory for tpu_custom_call.1']
    #allocation7 [shape = 's32[2]{0}', space=sflag, size = 0x8, scoped, tag = 'scoped memory for tpu_custom_call.1']
    #allocation8 [shape = 'u8[32768]{0}', space=vmem, size = 0x8000, scoped, tag = 'input window, operand 1, single buffered']
    #allocation9 [shape = 's32[1]{0}', space=sflag, size = 0x4, scoped, tag = 'scoped memory for tpu_custom_call.1']
    #allocation10 [shape = 'u8[32768]{0}', space=vmem, size = 0x8000, scoped, tag = 'input window, operand 2, single buffered']
    #allocation11 [shape = 'u8[32768]{0}', space=vmem, size = 0x8000, scoped, tag = 'input window, operand 3, single buffered']
    #allocation12 [shape = 's32[1]{0}', space=sflag, size = 0x4, scoped, tag = 'scoped memory for tpu_custom_call.1']
    #allocation13 [shape = 'u8[65536]{0}', space=vmem, size = 0x10000, scoped, tag = 'output window, operand 0']
    %15 = vsyncpa [#allocation6], 0
    %s16 = scalar_lea.sflag [#allocation6], 1
    %17 = vsyncpa %s16, 0
    %18 = vsyncpa [#allocation9], 0
    %19 = vsyncpa [#allocation12], 0
    %20 = vsyncpa [#allocation7], 0
    %s21 = scalar_lea.sflag [#allocation7], 1
    %22 = vsyncpa %s21, 0
    loop: start=0, step=1, limit=18
    $region2: #{tpu_custom_call.1} parent=1 // loop_pre_header
      _
    $region3: #{tpu_custom_call.1} parent=1 // loop_header
      %s24 = sphi 0, %s28
      %p25 = scmp.ge.s32.totalorder %s24, 18
      %s31 = sphi 0, %s43
      %s32 = sphi 0, %s39
      %s33 = sphi 0, %s31
      %s34 = sphi 0, %s32
      %s35 = sphi 0, %s33
      %s36 = sphi 0, %s34
      %s50 = sphi 0, %s52
      %s53 = sphi 0, %s50
      %s54 = sphi 0, %s53
      %s70 = sphi 0, %s54
      %s74 = sphi 0, %s74
      %s76 = sphi 0, %s74
      %s77 = sphi 0, %s76
      %s91 = sphi 0, %s77
      %s95 = sphi 0, %s95
      %s97 = sphi 0, %s95
      %s98 = sphi 0, %s97
      %s112 = sphi 0, %s98
      %s116 = sphi 0, %s116
      %s118 = sphi 0, %s116
      %s119 = sphi 0, %s118
      %s133 = sphi 0, %s119
      %s137 = sphi 0, %s137
      %s139 = sphi 0, %s137
      %s140 = sphi 0, %s139
      %s154 = sphi 0, %s140
      %s158 = sphi 0, %s158
      %s160 = sphi 0, %s158
      %s161 = sphi 0, %s160
      %s175 = sphi 0, %s161
      %s179 = sphi 0, %s179
      %s181 = sphi 0, %s179
      %s182 = sphi 0, %s181
      %s196 = sphi 0, %s182
      %s200 = sphi 0, %s200
      %s202 = sphi 0, %s200
      %s203 = sphi 0, %s202
      %s217 = sphi 0, %s203
      %s221 = sphi 0, %s221
      %s223 = sphi 0, %s221
      %s224 = sphi 0, %s223
      %s238 = sphi 0, %s224
      %s242 = sphi 0, %s242
      %s244 = sphi 0, %s242
      %s245 = sphi 0, %s244
      %s259 = sphi 0, %s245
      %s269 = sphi 0, %s271
      %s272 = sphi 0, %s269
      %s273 = sphi 0, %s272
      %s289 = sphi 0, %s273
    $region4: #{tpu_custom_call.1} parent=1 // loop_header_branch
      %27 = sbr.rel (%p25) target = $region8
    $region5: #{tpu_custom_call.1} parent=1 // loop_body
      %s29 = ssub.s32 %s24, 1
      %s30 = ssub.s32 %s24, 2
      %s37 = sadd.s32 1, %s32
      %p38 = scmp.ge.s32.totalorder %s37, 4
      %s39 = scalar_select %p38, 0, %s37
      %s40 = sadd.s32 1, %s31
      %s41 = scalar_select %p38, %s40, %s31
      %p42 = scmp.ge.s32.totalorder %s41, 4
      %s43 = scalar_select %p42, 0, %s41
      %p44 = scmp.eq.s32.totalorder %s31, 0
      %s45 = scalar_select %p44, %s32, 0
      %p46 = scmp.eq.s32.totalorder %s43, 0
      %s47 = scalar_select %p46, %s39, 0
      %s48 = ssub.s32 %s45, %s47
      %p49 = scmp.eq.s32.totalorder %s48, 0
      %s51 = sadd.s32 %s50, 1
      %s52 = scalar_select %p49, %s50, %s51
      %p55 = pneg %p49
      %p56 = scmp.eq.s32.totalorder %s24, 15
      %p57 = por %p55, %p56
      %p58 = scmp.ne.s32.totalorder %s50, %s53
      %p59 = scmp.eq.s32.totalorder %s24, 0
      %p60 = por %p58, %p59
      %p61 = scmp.ne.s32.totalorder %s50, %s53
      %p62 = scmp.eq.s32.totalorder %s29, 15
      %p63 = por %p61, %p62
      %p64 = scmp.ne.s32.totalorder %s53, %s54
      %p65 = scmp.eq.s32.totalorder %s29, 0
      %p66 = por %p64, %p65
      %p67 = scmp.ne.s32.totalorder %s53, %s54
      %p68 = scmp.eq.s32.totalorder %s30, 15
      %p69 = por %p67, %p68
      %p71 = scmp.ne.s32.totalorder %s54, %s70
      %p72 = scmp.eq.s32.totalorder %s30, 0
      %p73 = por %p71, %p72
      %s75 = sadd.s32 %s74, 1
      %p78 = scmp.eq.s32.totalorder %s24, 15
      %p79 = scmp.ne.s32.totalorder %s74, %s76
      %p80 = scmp.eq.s32.totalorder %s24, 0
      %p81 = por %p79, %p80
      %p82 = scmp.ne.s32.totalorder %s74, %s76
      %p83 = scmp.eq.s32.totalorder %s29, 15
      %p84 = por %p82, %p83
      %p85 = scmp.ne.s32.totalorder %s76, %s77
      %p86 = scmp.eq.s32.totalorder %s29, 0
      %p87 = por %p85, %p86
      %p88 = scmp.ne.s32.totalorder %s76, %s77
      %p89 = scmp.eq.s32.totalorder %s30, 15
      %p90 = por %p88, %p89
      %p92 = scmp.ne.s32.totalorder %s77, %s91
      %p93 = scmp.eq.s32.totalorder %s30, 0
      %p94 = por %p92, %p93
      %s96 = sadd.s32 %s95, 1
      %p99 = scmp.eq.s32.totalorder %s24, 15
      %p100 = scmp.ne.s32.totalorder %s95, %s97
      %p101 = scmp.eq.s32.totalorder %s24, 0
      %p102 = por %p100, %p101
      %p103 = scmp.ne.s32.totalorder %s95, %s97
      %p104 = scmp.eq.s32.totalorder %s29, 15
      %p105 = por %p103, %p104
      %p106 = scmp.ne.s32.totalorder %s97, %s98
      %p107 = scmp.eq.s32.totalorder %s29, 0
      %p108 = por %p106, %p107
      %p109 = scmp.ne.s32.totalorder %s97, %s98
      %p110 = scmp.eq.s32.totalorder %s30, 15
      %p111 = por %p109, %p110
      %p113 = scmp.ne.s32.totalorder %s98, %s112
      %p114 = scmp.eq.s32.totalorder %s30, 0
      %p115 = por %p113, %p114
      %s117 = sadd.s32 %s116, 1
      %p120 = scmp.eq.s32.totalorder %s24, 15
      %p121 = scmp.ne.s32.totalorder %s116, %s118
      %p122 = scmp.eq.s32.totalorder %s24, 0
      %p123 = por %p121, %p122
      %p124 = scmp.ne.s32.totalorder %s116, %s118
      %p125 = scmp.eq.s32.totalorder %s29, 15
      %p126 = por %p124, %p125
      %p127 = scmp.ne.s32.totalorder %s118, %s119
      %p128 = scmp.eq.s32.totalorder %s29, 0
      %p129 = por %p127, %p128
      %p130 = scmp.ne.s32.totalorder %s118, %s119
      %p131 = scmp.eq.s32.totalorder %s30, 15
      %p132 = por %p130, %p131
      %p134 = scmp.ne.s32.totalorder %s119, %s133
      %p135 = scmp.eq.s32.totalorder %s30, 0
      %p136 = por %p134, %p135
      %s138 = sadd.s32 %s137, 1
      %p141 = scmp.eq.s32.totalorder %s24, 15
      %p142 = scmp.ne.s32.totalorder %s137, %s139
      %p143 = scmp.eq.s32.totalorder %s24, 0
      %p144 = por %p142, %p143
      %p145 = scmp.ne.s32.totalorder %s137, %s139
      %p146 = scmp.eq.s32.totalorder %s29, 15
      %p147 = por %p145, %p146
      %p148 = scmp.ne.s32.totalorder %s139, %s140
      %p149 = scmp.eq.s32.totalorder %s29, 0
      %p150 = por %p148, %p149
      %p151 = scmp.ne.s32.totalorder %s139, %s140
      %p152 = scmp.eq.s32.totalorder %s30, 15
      %p153 = por %p151, %p152
      %p155 = scmp.ne.s32.totalorder %s140, %s154
      %p156 = scmp.eq.s32.totalorder %s30, 0
      %p157 = por %p155, %p156
      %s159 = sadd.s32 %s158, 1
      %p162 = scmp.eq.s32.totalorder %s24, 15
      %p163 = scmp.ne.s32.totalorder %s158, %s160
      %p164 = scmp.eq.s32.totalorder %s24, 0
      %p165 = por %p163, %p164
      %p166 = scmp.ne.s32.totalorder %s158, %s160
      %p167 = scmp.eq.s32.totalorder %s29, 15
      %p168 = por %p166, %p167
      %p169 = scmp.ne.s32.totalorder %s160, %s161
      %p170 = scmp.eq.s32.totalorder %s29, 0
      %p171 = por %p169, %p170
      %p172 = scmp.ne.s32.totalorder %s160, %s161
      %p173 = scmp.eq.s32.totalorder %s30, 15
      %p174 = por %p172, %p173
      %p176 = scmp.ne.s32.totalorder %s161, %s175
      %p177 = scmp.eq.s32.totalorder %s30, 0
      %p178 = por %p176, %p177
      %s180 = sadd.s32 %s179, 1
      %p183 = scmp.eq.s32.totalorder %s24, 15
      %p184 = scmp.ne.s32.totalorder %s179, %s181
      %p185 = scmp.eq.s32.totalorder %s24, 0
      %p186 = por %p184, %p185
      %p187 = scmp.ne.s32.totalorder %s179, %s181
      %p188 = scmp.eq.s32.totalorder %s29, 15
      %p189 = por %p187, %p188
      %p190 = scmp.ne.s32.totalorder %s181, %s182
      %p191 = scmp.eq.s32.totalorder %s29, 0
      %p192 = por %p190, %p191
      %p193 = scmp.ne.s32.totalorder %s181, %s182
      %p194 = scmp.eq.s32.totalorder %s30, 15
      %p195 = por %p193, %p194
      %p197 = scmp.ne.s32.totalorder %s182, %s196
      %p198 = scmp.eq.s32.totalorder %s30, 0
      %p199 = por %p197, %p198
      %s201 = sadd.s32 %s200, 1
      %p204 = scmp.eq.s32.totalorder %s24, 15
      %p205 = scmp.ne.s32.totalorder %s200, %s202
      %p206 = scmp.eq.s32.totalorder %s24, 0
      %p207 = por %p205, %p206
      %p208 = scmp.ne.s32.totalorder %s200, %s202
      %p209 = scmp.eq.s32.totalorder %s29, 15
      %p210 = por %p208, %p209
      %p211 = scmp.ne.s32.totalorder %s202, %s203
      %p212 = scmp.eq.s32.totalorder %s29, 0
      %p213 = por %p211, %p212
      %p214 = scmp.ne.s32.totalorder %s202, %s203
      %p215 = scmp.eq.s32.totalorder %s30, 15
      %p216 = por %p214, %p215
      %p218 = scmp.ne.s32.totalorder %s203, %s217
      %p219 = scmp.eq.s32.totalorder %s30, 0
      %p220 = por %p218, %p219
      %s222 = sadd.s32 %s221, 1
      %p225 = scmp.eq.s32.totalorder %s24, 15
      %p226 = scmp.ne.s32.totalorder %s221, %s223
      %p227 = scmp.eq.s32.totalorder %s24, 0
      %p228 = por %p226, %p227
      %p229 = scmp.ne.s32.totalorder %s221, %s223
      %p230 = scmp.eq.s32.totalorder %s29, 15
      %p231 = por %p229, %p230
      %p232 = scmp.ne.s32.totalorder %s223, %s224
      %p233 = scmp.eq.s32.totalorder %s29, 0
      %p234 = por %p232, %p233
      %p235 = scmp.ne.s32.totalorder %s223, %s224
      %p236 = scmp.eq.s32.totalorder %s30, 15
      %p237 = por %p235, %p236
      %p239 = scmp.ne.s32.totalorder %s224, %s238
      %p240 = scmp.eq.s32.totalorder %s30, 0
      %p241 = por %p239, %p240
      %s243 = sadd.s32 %s242, 1
      %p246 = scmp.eq.s32.totalorder %s24, 15
      %p247 = scmp.ne.s32.totalorder %s242, %s244
      %p248 = scmp.eq.s32.totalorder %s24, 0
      %p249 = por %p247, %p248
      %p250 = scmp.ne.s32.totalorder %s242, %s244
      %p251 = scmp.eq.s32.totalorder %s29, 15
      %p252 = por %p250, %p251
      %p253 = scmp.ne.s32.totalorder %s244, %s245
      %p254 = scmp.eq.s32.totalorder %s29, 0
      %p255 = por %p253, %p254
      %p256 = scmp.ne.s32.totalorder %s244, %s245
      %p257 = scmp.eq.s32.totalorder %s30, 15
      %p258 = por %p256, %p257
      %p260 = scmp.ne.s32.totalorder %s245, %s259
      %p261 = scmp.eq.s32.totalorder %s30, 0
      %p262 = por %p260, %p261
      %p263 = scmp.eq.s32.totalorder %s31, 3
      %s264 = scalar_select %p263, %s32, 0
      %p265 = scmp.eq.s32.totalorder %s43, 3
      %s266 = scalar_select %p265, %s39, 0
      %s267 = ssub.s32 %s264, %s266
      %p268 = scmp.eq.s32.totalorder %s267, 0
      %s270 = sadd.s32 %s269, 1
      %s271 = scalar_select %p268, %s269, %s270
      %p274 = pneg %p268
      %p275 = scmp.eq.s32.totalorder %s24, 15
      %p276 = por %p274, %p275
      %p277 = scmp.ne.s32.totalorder %s269, %s272
      %p278 = scmp.eq.s32.totalorder %s24, 0
      %p279 = por %p277, %p278
      %p280 = scmp.ne.s32.totalorder %s269, %s272
      %p281 = scmp.eq.s32.totalorder %s29, 15
      %p282 = por %p280, %p281
      %p283 = scmp.ne.s32.totalorder %s272, %s273
      %p284 = scmp.eq.s32.totalorder %s29, 0
      %p285 = por %p283, %p284
      %p286 = scmp.ne.s32.totalorder %s272, %s273
      %p287 = scmp.eq.s32.totalorder %s30, 15
      %p288 = por %p286, %p287
      %p290 = scmp.ne.s32.totalorder %s273, %s289
      %p291 = scmp.eq.s32.totalorder %s30, 0
      %p292 = por %p290, %p291
      %p293 = scmp.le.s32.totalorder 1, %s24
      %p294 = scmp.lt.s32.totalorder %s24, 17
      %p295 = pnand %p293, %p294
      %p296 = pneg %p295
      // Predicated region
      $region9: #{tpu_custom_call.1} parent=5 // pred_check
        _
      $region10: #{tpu_custom_call.1} parent=5 // pred_check_branch
        %298 = sbr.rel (%p295) target = $region12
      $region11: #{tpu_custom_call.1} parent=5 // pred_region
        %s299 = ssub.s32 %s24, 1
        // Predicated region
        $region13: #{tpu_custom_call.1} parent=11 // pred_check
          %p300 = pneg %p87
        $region14: #{tpu_custom_call.1} parent=11 // pred_check_branch
          %302 = sbr.rel (%p300) target = $region16
        $region15: #{tpu_custom_call.1} parent=11 // pred_region
          %s304 = ssub.s32 1024, 1024
          %305 = vsyncadd [#allocation9], %s304
          %s306 = sshll.u32 [#allocation8], 4
          %s307 = int_to_ptr.vmem [resolvable:$true] %s306
          %312 = dma.hbm_to_vmem [thread:$0]  %s1, 1024, %s307, [#allocation9], 64, 64, 4
        $region16: #{tpu_custom_call.1} parent=11 // pred_fallthru
          _
        // Predicated region
        $region17: #{tpu_custom_call.1} parent=11 // pred_check
          %p313 = pneg %p108
        $region18: #{tpu_custom_call.1} parent=11 // pred_check_branch
          %315 = sbr.rel (%p313) target = $region20
        $region19: #{tpu_custom_call.1} parent=11 // pred_region
          %s317 = ssub.s32 1024, 1024
          %318 = vsyncadd [#allocation9], %s317
          %s319 = sshll.u32 [#allocation10], 4
          %s320 = int_to_ptr.vmem [resolvable:$true] %s319
          %325 = dma.hbm_to_vmem [thread:$0]  %s2, 1024, %s320, [#allocation9], 64, 64, 4
        $region20: #{tpu_custom_call.1} parent=11 // pred_fallthru
          _
        // Predicated region
        $region21: #{tpu_custom_call.1} parent=11 // pred_check
          %p326 = pneg %p129
        $region22: #{tpu_custom_call.1} parent=11 // pred_check_branch
          %328 = sbr.rel (%p326) target = $region24
        $region23: #{tpu_custom_call.1} parent=11 // pred_region
          %s330 = ssub.s32 1024, 1024
          %331 = vsyncadd [#allocation12], %s330
          %s332 = sshll.u32 [#allocation11], 4
          %s333 = int_to_ptr.vmem [resolvable:$true] %s332
          %338 = dma.hbm_to_vmem [thread:$0]  %s3, 1024, %s333, [#allocation12], 64, 64, 4
        $region24: #{tpu_custom_call.1} parent=11 // pred_fallthru
          _
        // Predicated region
        $region25: #{tpu_custom_call.1} parent=11 // pred_check
          %p339 = pneg %p150
        $region26: #{tpu_custom_call.1} parent=11 // pred_check_branch
          %341 = sbr.rel (%p339) target = $region28
        $region27: #{tpu_custom_call.1} parent=11 // pred_region
          _
        $region28: #{tpu_custom_call.1} parent=11 // pred_fallthru
          _
        // Predicated region
        $region29: #{tpu_custom_call.1} parent=11 // pred_check
          %p342 = pneg %p171
        $region30: #{tpu_custom_call.1} parent=11 // pred_check_branch
          %344 = sbr.rel (%p342) target = $region32
        $region31: #{tpu_custom_call.1} parent=11 // pred_region
          _
        $region32: #{tpu_custom_call.1} parent=11 // pred_fallthru
          _
        // Predicated region
        $region33: #{tpu_custom_call.1} parent=11 // pred_check
          %p345 = pneg %p192
        $region34: #{tpu_custom_call.1} parent=11 // pred_check_branch
          %347 = sbr.rel (%p345) target = $region36
        $region35: #{tpu_custom_call.1} parent=11 // pred_region
          _
        $region36: #{tpu_custom_call.1} parent=11 // pred_fallthru
          _
        // Predicated region
        $region37: #{tpu_custom_call.1} parent=11 // pred_check
          %p348 = pneg %p213
        $region38: #{tpu_custom_call.1} parent=11 // pred_check_branch
          %350 = sbr.rel (%p348) target = $region40
        $region39: #{tpu_custom_call.1} parent=11 // pred_region
          _
        $region40: #{tpu_custom_call.1} parent=11 // pred_fallthru
          _
        // Predicated region
        $region41: #{tpu_custom_call.1} parent=11 // pred_check
          %p351 = pneg %p234
        $region42: #{tpu_custom_call.1} parent=11 // pred_check_branch
          %353 = sbr.rel (%p351) target = $region44
        $region43: #{tpu_custom_call.1} parent=11 // pred_region
          _
        $region44: #{tpu_custom_call.1} parent=11 // pred_fallthru
          _
        // Predicated region
        $region45: #{tpu_custom_call.1} parent=11 // pred_check
          %p354 = pneg %p255
        $region46: #{tpu_custom_call.1} parent=11 // pred_check_branch
          %356 = sbr.rel (%p354) target = $region48
        $region47: #{tpu_custom_call.1} parent=11 // pred_region
          _
        $region48: #{tpu_custom_call.1} parent=11 // pred_fallthru
          _
      $region12: #{tpu_custom_call.1} parent=5 // pred_fallthru
        _
      %p357 = scmp.lt.s32.totalorder %s24, 16
      // Predicated region
      $region49: #{tpu_custom_call.1} parent=5 // pred_check
        %p358 = pneg %p357
      $region50: #{tpu_custom_call.1} parent=5 // pred_check_branch
        %360 = sbr.rel (%p358) target = $region52
      $region51: #{tpu_custom_call.1} parent=5 // pred_region
        // Predicated region
        $region53: #{tpu_custom_call.1} parent=51 // pred_check
          %p361 = pneg %p60
        $region54: #{tpu_custom_call.1} parent=51 // pred_check_branch
          %363 = sbr.rel (%p361) target = $region56
        $region55: #{tpu_custom_call.1} parent=51 // pred_region
          %s364 = sand.u32 %s50, 1
          %s365 = scalar_lea.sflag [#allocation6], %s364
          %s366 = sand.u32 %s50, 1
          %s367 = smul.addr %s366, 64
          %s368 = scalar_lea.vmem [#allocation5], %s367
          %p369 = scmp.eq.s32.totalorder %s31, 0
          %s370 = scalar_select %p369, %s32, 0
          %s371 = smul.u32 8, %s370
          %s373 = ssub.s32 1024, 1024
          %374 = vsyncadd %s365, %s373
          %s375 = smul.addr %s371, 128
          %s376 = scalar_lea.hbm %s0, %s375
          %s377 = sshll.u32 %s368, 4
          %s378 = int_to_ptr.vmem [resolvable:$true] %s377
          %383 = dma.hbm_to_vmem [thread:$0]  %s376, 1024, %s378, %s365, 128, 128, 8
        $region56: #{tpu_custom_call.1} parent=51 // pred_fallthru
          _
      $region52: #{tpu_custom_call.1} parent=5 // pred_fallthru
        _
      %p384 = scmp.le.s32.totalorder 1, %s24
      %p385 = scmp.lt.s32.totalorder %s24, 17
      %p386 = pnand %p384, %p385
      %p387 = pneg %p386
      // Predicated region
      $region57: #{tpu_custom_call.1} parent=5 // pred_check
        _
      $region58: #{tpu_custom_call.1} parent=5 // pred_check_branch
        %389 = sbr.rel (%p386) target = $region60
      $region59: #{tpu_custom_call.1} parent=5 // pred_region
        %s390 = ssub.s32 %s24, 1
        %s391 = sand.u32 %s53, 1
        %s392 = scalar_lea.sflag [#allocation6], %s391
        %s393 = sand.u32 %s53, 1
        %s394 = smul.addr %s393, 64
        %s395 = scalar_lea.vmem [#allocation5], %s394
        // Predicated region
        $region61: #{tpu_custom_call.1} parent=59 // pred_check
          %p396 = pneg %p66
        $region62: #{tpu_custom_call.1} parent=59 // pred_check_branch
          %398 = sbr.rel (%p396) target = $region64
        $region63: #{tpu_custom_call.1} parent=59 // pred_region
          %399 = dma.done %s392, 1024
        $region64: #{tpu_custom_call.1} parent=59 // pred_fallthru
          _
        // Predicated region
        $region65: #{tpu_custom_call.1} parent=59 // pred_check
          %p400 = pneg %p87
        $region66: #{tpu_custom_call.1} parent=59 // pred_check_branch
          %402 = sbr.rel (%p400) target = $region68
        $region67: #{tpu_custom_call.1} parent=59 // pred_region
          %403 = dma.done [#allocation9], 1024
        $region68: #{tpu_custom_call.1} parent=59 // pred_fallthru
          _
        // Predicated region
        $region69: #{tpu_custom_call.1} parent=59 // pred_check
          %p404 = pneg %p108
        $region70: #{tpu_custom_call.1} parent=59 // pred_check_branch
          %406 = sbr.rel (%p404) target = $region72
        $region71: #{tpu_custom_call.1} parent=59 // pred_region
          %407 = dma.done [#allocation9], 1024
        $region72: #{tpu_custom_call.1} parent=59 // pred_fallthru
          _
        // Predicated region
        $region73: #{tpu_custom_call.1} parent=59 // pred_check
          %p408 = pneg %p129
        $region74: #{tpu_custom_call.1} parent=59 // pred_check_branch
          %410 = sbr.rel (%p408) target = $region76
        $region75: #{tpu_custom_call.1} parent=59 // pred_region
          %411 = dma.done [#allocation12], 1024
        $region76: #{tpu_custom_call.1} parent=59 // pred_fallthru
          _
        %s412 = sand.u32 %s53, 1
        %s413 = scalar_lea.sflag [#allocation6], %s412
        %s414 = sand.u32 %s53, 1
        %s415 = smul.addr %s414, 64
        %s416 = scalar_lea.vmem [#allocation5], %s415
        %p417 = pneg %p66
        %p418 = pneg %p63
        %p419 = pneg %p87
        %p420 = pneg %p84
        %p421 = pneg %p108
        %p422 = pneg %p105
        %p423 = pneg %p129
        %p424 = pneg %p126
        %p425 = pneg %p150
        %p426 = pneg %p147
        %p427 = pneg %p171
        %p428 = pneg %p168
        %p429 = pneg %p192
        %p430 = pneg %p189
        %p431 = pneg %p213
        %p432 = pneg %p210
        %p433 = pneg %p234
        %p434 = pneg %p231
        %p435 = pneg %p255
        %p436 = pneg %p252
        %p437 = pneg %p285
        %p438 = pneg %p282
        %s439 = sand.u32 %s272, 1
        %s440 = scalar_lea.sflag [#allocation7], %s439
        %s441 = sand.u32 %s272, 1
        %s442 = smul.addr %s441, 64
        %s443 = scalar_lea.vmem [#allocation13], %s442
        %p444 = scmp.eq.s32.totalorder %s33, 0
        %s445 = scalar_select %p444, %s34, 0
        %s446 = smul.u32 8, %s445
        %p447 = scmp.eq.s32.totalorder %s33, 3
        %s448 = scalar_select %p447, %s34, 0
        %s449 = smul.u32 8, %s448
        %s451 = smul.u32 %s34, 64
        %p452 = scmp.eq.s32.totalorder %s34, 0
        %p453 = scmp.eq.s32.totalorder %s33, 1
        %p454 = pnand %p452, %p453
        %p455 = pneg %p454
        // Predicated region
        $region77: #{tpu_custom_call.1} parent=59 // pred_check
          _
        $region78: #{tpu_custom_call.1} parent=59 // pred_check_branch
          %457 = sbr.rel (%p454) target = $region80
        $region79: #{tpu_custom_call.1} parent=59 // pred_region
          %v458 = vld [vmem:[#allocation3] sm:$0x1]
          %v459 = vmul.f32 %v458, 0.00390625
          %v460 = vld [vmem:[#allocation3 + $0x1] sm:$0x1]
          %v461 = vmul.f32 %v460, 0.00390625
          %v462 = vmul.f32 %v459, %v459
          %v463 = vsub.f32 %v461, %v462
          %v464 = vld [vmem:[%s4] sm:$0x1]
          %v465 = vadd.f32 %v463, 1e-05
          %v466 = vrsqrt.pop %v465
          %v467 = vmul.f32 %v464, %v466
          %468 = vst [vmem:[#allocation4] sm:$0x1] %v467
          %v469 = vld [vmem:[%s5] sm:$0x1]
          %v470 = vmul.f32 %v459, %v467
          %v471 = vsub.f32 %v469, %v470
          %472 = vst [vmem:[#allocation4 + $0x1] sm:$0x1] %v471
        $region80: #{tpu_custom_call.1} parent=59 // pred_fallthru
          _
        %p473 = scmp.eq.s32.totalorder %s33, 2
        %p474 = pnand %p452, %p473
        %p475 = pneg %p474
        // Predicated region
        $region81: #{tpu_custom_call.1} parent=59 // pred_check
          _
        $region82: #{tpu_custom_call.1} parent=59 // pred_check_branch
          %477 = sbr.rel (%p474) target = $region84
        $region83: #{tpu_custom_call.1} parent=59 // pred_region
          %v478 = vld [vmem:[#allocation3] sm:$0x1]
          %v479 = vmul.f32 %v478, 0.00390625
          %v480 = vld [vmem:[#allocation3 + $0x1] sm:$0x1]
          %v481 = vmul.f32 %v480, 0.00390625
          %v482 = vmul.f32 %v479, %v479
          %v483 = vsub.f32 %v481, %v482
          %v484 = vld [vmem:[%s6] sm:$0x1]
          %v485 = vadd.f32 %v483, 1e-05
          %v486 = vrsqrt.pop %v485
          %v487 = vmul.f32 %v484, %v486
          %488 = vst [vmem:[#allocation4] sm:$0x1] %v487
          %v489 = vld [vmem:[%s7] sm:$0x1]
          %v490 = vmul.f32 %v479, %v487
          %v491 = vsub.f32 %v489, %v490
          %492 = vst [vmem:[#allocation4 + $0x1] sm:$0x1] %v491
        $region84: #{tpu_custom_call.1} parent=59 // pred_fallthru
          _
        %p493 = scmp.eq.s32.totalorder %s33, 3
        %p494 = pnand %p452, %p493
        %p495 = pneg %p494
        // Predicated region
        $region85: #{tpu_custom_call.1} parent=59 // pred_check
          _
        $region86: #{tpu_custom_call.1} parent=59 // pred_check_branch
          %497 = sbr.rel (%p494) target = $region88
        $region87: #{tpu_custom_call.1} parent=59 // pred_region
          %v498 = vld [vmem:[#allocation3] sm:$0x1]
          %v499 = vmul.f32 %v498, 0.00390625
          %v500 = vld [vmem:[#allocation3 + $0x1] sm:$0x1]
          %v501 = vmul.f32 %v500, 0.00390625
          %v502 = vmul.f32 %v499, %v499
          %v503 = vsub.f32 %v501, %v502
          %v504 = vld [vmem:[%s8] sm:$0x1]
          %v505 = vadd.f32 %v503, 1e-05
          %v506 = vrsqrt.pop %v505
          %v507 = vmul.f32 %v504, %v506
          %508 = vst [vmem:[#allocation4] sm:$0x1] %v507
          %v509 = vld [vmem:[%s9] sm:$0x1]
          %v510 = vmul.f32 %v499, %v507
          %v511 = vsub.f32 %v509, %v510
          %512 = vst [vmem:[#allocation4 + $0x1] sm:$0x1] %v511
        $region88: #{tpu_custom_call.1} parent=59 // pred_fallthru
          _
        // Predicated region
        $region89: #{tpu_custom_call.1} parent=59 // pred_check
          %p513 = pneg %p452
        $region90: #{tpu_custom_call.1} parent=59 // pred_check_branch
          %515 = sbr.rel (%p513) target = $region92
        $region91: #{tpu_custom_call.1} parent=59 // pred_region
          %516 = vst [vmem:[#allocation3] sm:$0x3] 0.0
        $region92: #{tpu_custom_call.1} parent=59 // pred_fallthru
          _
        %p517 = scmp.eq.s32.totalorder %s33, 0
        // Predicated region
        $region93: #{tpu_custom_call.1} parent=59 // pred_check
          %p518 = pneg %p517
        $region94: #{tpu_custom_call.1} parent=59 // pred_check_branch
          %520 = sbr.rel (%p518) target = $region96
        $region95: #{tpu_custom_call.1} parent=59 // pred_region
          %v521 = vld [vmem:[%s395] sm:$0xff]
          %v522 = vld [vmem:[%s395 + $0x8] sm:$0xff]
          %v523 = vld [vmem:[%s395 + $0x10] sm:$0xff]
          %v524 = vld [vmem:[%s395 + $0x18] sm:$0xff]
          %v525 = vld [vmem:[%s395 + $0x20] sm:$0xff]
          %v526 = vld [vmem:[%s395 + $0x28] sm:$0xff]
          %v527 = vld [vmem:[%s395 + $0x30] sm:$0xff]
          %v528 = vld [vmem:[%s395 + $0x38] sm:$0xff]
          %v529 = vpack.c.bf16 %v522, %v521
          %v530 = vpack.c.bf16 %v524, %v523
          %v531 = vpack.c.bf16 %v526, %v525
          %v532 = vpack.c.bf16 %v528, %v527
          %v533 = vld [vmem:[#allocation8] sm:$0xf]
          %v534 = vld [vmem:[#allocation8 + $0x4] sm:$0xf]
          %v535 = vld [vmem:[#allocation8 + $0x8] sm:$0xf]
          %v536 = vld [vmem:[#allocation8 + $0xc] sm:$0xf]
          %v537 = vld [vmem:[#allocation8 + $0x10] sm:$0xf]
          %v538 = vld [vmem:[#allocation8 + $0x14] sm:$0xf]
          %v539 = vld [vmem:[#allocation8 + $0x18] sm:$0xf]
          %v540 = vld [vmem:[#allocation8 + $0x1c] sm:$0xf]
          %v541 = vld [vmem:[#allocation8 + $0x20] sm:$0xf]
          %v542 = vld [vmem:[#allocation8 + $0x24] sm:$0xf]
          %v543 = vld [vmem:[#allocation8 + $0x28] sm:$0xf]
          %v544 = vld [vmem:[#allocation8 + $0x2c] sm:$0xf]
          %v545 = vld [vmem:[#allocation8 + $0x30] sm:$0xf]
          %v546 = vld [vmem:[#allocation8 + $0x34] sm:$0xf]
          %v547 = vld [vmem:[#allocation8 + $0x38] sm:$0xf]
          %v548 = vld [vmem:[#allocation8 + $0x3c] sm:$0xf]
          %v565 = vunpack.c.l.b16 %v533
          %v566 = vunpack.c.l.b16 %v534
          %v567 = vunpack.c.l.b16 %v535
          %v568 = vunpack.c.l.b16 %v536
          %v569 = vunpack.c.l.b16 %v537
          %v570 = vunpack.c.l.b16 %v538
          %v571 = vunpack.c.l.b16 %v539
          %v572 = vunpack.c.l.b16 %v540
          %v573 = vunpack.c.l.b16 %v541
          %v574 = vunpack.c.l.b16 %v542
          %v575 = vunpack.c.l.b16 %v543
          %v576 = vunpack.c.l.b16 %v544
          %v577 = vunpack.c.l.b16 %v545
          %v578 = vunpack.c.l.b16 %v546
          %v579 = vunpack.c.l.b16 %v547
          %v580 = vunpack.c.l.b16 %v548
          %v581 = vpack.c.b16 %v566, %v565
          %v582 = vpack.c.b16 %v568, %v567
          %v583 = vpack.c.b16 %v570, %v569
          %v584 = vpack.c.b16 %v572, %v571
          %v585 = vpack.c.b16 %v574, %v573
          %v586 = vpack.c.b16 %v576, %v575
          %v587 = vpack.c.b16 %v578, %v577
          %v588 = vpack.c.b16 %v580, %v579
          %597 = vmatprep.subr.bf16.mxu0 0
          %598 = vmatpush1.bf16.msra.mxu0 %v588
          %599 = vmatprep.subr.bf16.mxu0 0
          %600 = vmatpush1.bf16.msra.mxu0 %v587
          %601 = vmatprep.subr.bf16.mxu0 0
          %602 = vmatpush1.bf16.msra.mxu0 %v586
          %603 = vmatprep.subr.bf16.mxu0 0
          %604 = vmatpush1.bf16.msra.mxu0 %v585
          %605 = vmatprep.subr.bf16.mxu0 0
          %606 = vmatpush1.bf16.msra.mxu0 %v584
          %607 = vmatprep.subr.bf16.mxu0 0
          %608 = vmatpush1.bf16.msra.mxu0 %v583
          %609 = vmatprep.subr.bf16.mxu0 0
          %610 = vmatpush1.bf16.msra.mxu0 %v582
          %611 = vmatprep.subr.bf16.mxu0 0
          %612 = vmatpush1.bf16.msra.mxu0 %v581
          %613 = vmatprep.subr.bf16.mxu0 0
          %614 = vmatpush2.bf16.msra.mxu0 0
          %615 = vmatprep.subr.bf16.mxu0 0
          %616 = vmatpush2.bf16.msra.mxu0 0
          %617 = vmatprep.subr.bf16.mxu0 0
          %618 = vmatpush2.bf16.msra.mxu0 0
          %619 = vmatprep.subr.bf16.mxu0 0
          %620 = vmatpush2.bf16.msra.mxu0 0
          %621 = vmatprep.subr.bf16.mxu0 0
          %622 = vmatpush2.bf16.msra.mxu0 0
          %623 = vmatprep.subr.bf16.mxu0 0
          %624 = vmatpush2.bf16.msra.mxu0 0
          %625 = vmatprep.subr.bf16.mxu0 0
          %626 = vmatpush2.bf16.msra.mxu0 0
          %627 = vmatprep.subr.bf16.mxu0 0
          %628 = vmatpush2.bf16.msra.mxu0 0
          %629 = vmatprep.mubr.bf16.mxu0 0
          %630 = vmatmul.mubr.bf16.gmra.mxu0 %v529
          %v631 = vpop.f32.mrf.mxu0
          %v632 = vadd.f32 0.0, %v631
          %v633 = vpop.f32.mrf.mxu0
          %v634 = vpop.f32.mrf.mxu0
          %v635 = vadd.f32 0.0, %v634
          %v636 = vpop.f32.mrf.mxu0
          %637 = vmatprep.mubr.bf16.mxu0 0
          %638 = vmatmul.mubr.bf16.gmra.mxu0 %v530
          %v639 = vpop.f32.mrf.mxu0
          %v640 = vadd.f32 0.0, %v639
          %v641 = vpop.f32.mrf.mxu0
          %v642 = vpop.f32.mrf.mxu0
          %v643 = vadd.f32 0.0, %v642
          %v644 = vpop.f32.mrf.mxu0
          %645 = vmatprep.mubr.bf16.mxu0 0
          %646 = vmatmul.mubr.bf16.gmra.mxu0 %v531
          %v647 = vpop.f32.mrf.mxu0
          %v648 = vadd.f32 0.0, %v647
          %v649 = vpop.f32.mrf.mxu0
          %v650 = vpop.f32.mrf.mxu0
          %v651 = vadd.f32 0.0, %v650
          %v652 = vpop.f32.mrf.mxu0
          %653 = vmatprep.mubr.bf16.mxu0 0
          %654 = vmatmul.mubr.bf16.gmra.mxu0 %v532
          %v655 = vpop.f32.mrf.mxu0
          %v656 = vadd.f32 0.0, %v655
          %v657 = vpop.f32.mrf.mxu0
          %v658 = vpop.f32.mrf.mxu0
          %v659 = vadd.f32 0.0, %v658
          %v660 = vpop.f32.mrf.mxu0
          %661 = vdwg.mxu0
          %s662 = scalar_lea.vmem [#allocation2], %s451
          %663 = vst [vmem:[%s662] sm:$0xff] %v632
          %664 = vst [vmem:[%s662 + $0x8] sm:$0xff] %v635
          %665 = vst [vmem:[%s662 + $0x10] sm:$0xff] %v640
          %666 = vst [vmem:[%s662 + $0x18] sm:$0xff] %v643
          %667 = vst [vmem:[%s662 + $0x20] sm:$0xff] %v648
          %668 = vst [vmem:[%s662 + $0x28] sm:$0xff] %v651
          %669 = vst [vmem:[%s662 + $0x30] sm:$0xff] %v656
          %670 = vst [vmem:[%s662 + $0x38] sm:$0xff] %v659
          %v671 = vld [vmem:[#allocation3] sm:$0x1]
          %v672 = vadd.f32 %v632, %v635
          %v673 = vadd.f32 %v672, %v640
          %v674 = vadd.f32 %v673, %v643
          %v675 = vadd.f32 %v674, %v648
          %v676 = vadd.f32 %v675, %v651
          %v677 = vadd.f32 %v676, %v656
          %v678 = vadd.f32 %v677, %v659
          %v679 = vrot.slane %v678, 4
          %v680 = vadd.f32 %v678, %v679
          %v681 = vrot.slane %v680, 2
          %v682 = vadd.f32 %v680, %v681
          %v683 = vrot.slane %v682, 1
          %v684 = vadd.f32 %v682, %v683
          %v685 = vadd.f32 %v671, %v684
          %686 = vst [vmem:[#allocation3] sm:$0x1] %v685
          %v687 = vld [vmem:[#allocation3 + $0x1] sm:$0x1]
          %v688 = vmul.f32 %v632, %v632
          %v689 = vmul.f32 %v635, %v635
          %v690 = vmul.f32 %v640, %v640
          %v691 = vmul.f32 %v643, %v643
          %v692 = vmul.f32 %v648, %v648
          %v693 = vmul.f32 %v651, %v651
          %v694 = vmul.f32 %v656, %v656
          %v695 = vmul.f32 %v659, %v659
          %v696 = vadd.f32 %v688, %v689
          %v697 = vadd.f32 %v696, %v690
          %v698 = vadd.f32 %v697, %v691
          %v699 = vadd.f32 %v698, %v692
          %v700 = vadd.f32 %v699, %v693
          %v701 = vadd.f32 %v700, %v694
          %v702 = vadd.f32 %v701, %v695
          %v703 = vrot.slane %v702, 4
          %v704 = vadd.f32 %v702, %v703
          %v705 = vrot.slane %v704, 2
          %v706 = vadd.f32 %v704, %v705
          %v707 = vrot.slane %v706, 1
          %v708 = vadd.f32 %v706, %v707
          %v709 = vadd.f32 %v687, %v708
          %710 = vst [vmem:[#allocation3 + $0x1] sm:$0x1] %v709
        $region96: #{tpu_custom_call.1} parent=59 // pred_fallthru
          _
        // Predicated region
        $region97: #{tpu_custom_call.1} parent=59 // pred_check
          %p711 = pneg %p453
        $region98: #{tpu_custom_call.1} parent=59 // pred_check_branch
          %713 = sbr.rel (%p711) target = $region100
        $region99: #{tpu_custom_call.1} parent=59 // pred_region
          %s714 = scalar_lea.vmem [#allocation2], %s451
          %v715 = vld [vmem:[%s714] sm:$0xff]
          %v716 = vld [vmem:[%s714 + $0x8] sm:$0xff]
          %v717 = vld [vmem:[%s714 + $0x10] sm:$0xff]
          %v718 = vld [vmem:[%s714 + $0x18] sm:$0xff]
          %v719 = vld [vmem:[%s714 + $0x20] sm:$0xff]
          %v720 = vld [vmem:[%s714 + $0x28] sm:$0xff]
          %v721 = vld [vmem:[%s714 + $0x30] sm:$0xff]
          %v722 = vld [vmem:[%s714 + $0x38] sm:$0xff]
          %v723 = vld [vmem:[#allocation4] sm:$0x1]
          %v724 = vlaneseq
          %v725 = vshrl.u32 %v724, 7
          %v726 = vsub.s32 0, %v725
          %v727 = vrot.slane %v723, %v726
          %v728 = vmul.f32 %v715, %v727
          %v729 = vmul.f32 %v716, %v727
          %v730 = vmul.f32 %v717, %v727
          %v731 = vmul.f32 %v718, %v727
          %v732 = vmul.f32 %v719, %v727
          %v733 = vmul.f32 %v720, %v727
          %v734 = vmul.f32 %v721, %v727
          %v735 = vmul.f32 %v722, %v727
          %v736 = vld [vmem:[#allocation4 + $0x1] sm:$0x1]
          %v737 = vlaneseq
          %v738 = vshrl.u32 %v737, 7
          %v739 = vsub.s32 0, %v738
          %v740 = vrot.slane %v736, %v739
          %v741 = vadd.f32 %v728, %v740
          %v742 = vadd.f32 %v729, %v740
          %v743 = vadd.f32 %v730, %v740
          %v744 = vadd.f32 %v731, %v740
          %v745 = vadd.f32 %v732, %v740
          %v746 = vadd.f32 %v733, %v740
          %v747 = vadd.f32 %v734, %v740
          %v748 = vadd.f32 %v735, %v740
          %v749 = vmax.f32 %v741, 0.0
          %v750 = vmax.f32 %v742, 0.0
          %v751 = vmax.f32 %v743, 0.0
          %v752 = vmax.f32 %v744, 0.0
          %v753 = vmax.f32 %v745, 0.0
          %v754 = vmax.f32 %v746, 0.0
          %v755 = vmax.f32 %v747, 0.0
          %v756 = vmax.f32 %v748, 0.0
          %v757 = vpack.c.bf16 %v750, %v749
          %v758 = vpack.c.bf16 %v752, %v751
          %v759 = vpack.c.bf16 %v754, %v753
          %v760 = vpack.c.bf16 %v756, %v755
          %v761 = vld [vmem:[#allocation10] sm:$0xf]
          %v762 = vld [vmem:[#allocation10 + $0x4] sm:$0xf]
          %v763 = vld [vmem:[#allocation10 + $0x8] sm:$0xf]
          %v764 = vld [vmem:[#allocation10 + $0xc] sm:$0xf]
          %v765 = vld [vmem:[#allocation10 + $0x10] sm:$0xf]
          %v766 = vld [vmem:[#allocation10 + $0x14] sm:$0xf]
          %v767 = vld [vmem:[#allocation10 + $0x18] sm:$0xf]
          %v768 = vld [vmem:[#allocation10 + $0x1c] sm:$0xf]
          %v769 = vld [vmem:[#allocation10 + $0x20] sm:$0xf]
          %v770 = vld [vmem:[#allocation10 + $0x24] sm:$0xf]
          %v771 = vld [vmem:[#allocation10 + $0x28] sm:$0xf]
          %v772 = vld [vmem:[#allocation10 + $0x2c] sm:$0xf]
          %v773 = vld [vmem:[#allocation10 + $0x30] sm:$0xf]
          %v774 = vld [vmem:[#allocation10 + $0x34] sm:$0xf]
          %v775 = vld [vmem:[#allocation10 + $0x38] sm:$0xf]
          %v776 = vld [vmem:[#allocation10 + $0x3c] sm:$0xf]
          %v793 = vunpack.c.l.b16 %v761
          %v794 = vunpack.c.l.b16 %v762
          %v795 = vunpack.c.l.b16 %v763
          %v796 = vunpack.c.l.b16 %v764
          %v797 = vunpack.c.l.b16 %v765
          %v798 = vunpack.c.l.b16 %v766
          %v799 = vunpack.c.l.b16 %v767
          %v800 = vunpack.c.l.b16 %v768
          %v801 = vunpack.c.l.b16 %v769
          %v802 = vunpack.c.l.b16 %v770
          %v803 = vunpack.c.l.b16 %v771
          %v804 = vunpack.c.l.b16 %v772
          %v805 = vunpack.c.l.b16 %v773
          %v806 = vunpack.c.l.b16 %v774
          %v807 = vunpack.c.l.b16 %v775
          %v808 = vunpack.c.l.b16 %v776
          %v809 = vpack.c.b16 %v794, %v793
          %v810 = vpack.c.b16 %v796, %v795
          %v811 = vpack.c.b16 %v798, %v797
          %v812 = vpack.c.b16 %v800, %v799
          %v813 = vpack.c.b16 %v802, %v801
          %v814 = vpack.c.b16 %v804, %v803
          %v815 = vpack.c.b16 %v806, %v805
          %v816 = vpack.c.b16 %v808, %v807
          %825 = vmatprep.subr.bf16.mxu0 0
          %826 = vmatpush1.bf16.msra.mxu0 %v816
          %827 = vmatprep.subr.bf16.mxu0 0
          %828 = vmatpush1.bf16.msra.mxu0 %v815
          %829 = vmatprep.subr.bf16.mxu0 0
          %830 = vmatpush1.bf16.msra.mxu0 %v814
          %831 = vmatprep.subr.bf16.mxu0 0
          %832 = vmatpush1.bf16.msra.mxu0 %v813
          %833 = vmatprep.subr.bf16.mxu0 0
          %834 = vmatpush1.bf16.msra.mxu0 %v812
          %835 = vmatprep.subr.bf16.mxu0 0
          %836 = vmatpush1.bf16.msra.mxu0 %v811
          %837 = vmatprep.subr.bf16.mxu0 0
          %838 = vmatpush1.bf16.msra.mxu0 %v810
          %839 = vmatprep.subr.bf16.mxu0 0
          %840 = vmatpush1.bf16.msra.mxu0 %v809
          %841 = vmatprep.subr.bf16.mxu0 0
          %842 = vmatpush2.bf16.msra.mxu0 0
          %843 = vmatprep.subr.bf16.mxu0 0
          %844 = vmatpush2.bf16.msra.mxu0 0
          %845 = vmatprep.subr.bf16.mxu0 0
          %846 = vmatpush2.bf16.msra.mxu0 0
          %847 = vmatprep.subr.bf16.mxu0 0
          %848 = vmatpush2.bf16.msra.mxu0 0
          %849 = vmatprep.subr.bf16.mxu0 0
          %850 = vmatpush2.bf16.msra.mxu0 0
          %851 = vmatprep.subr.bf16.mxu0 0
          %852 = vmatpush2.bf16.msra.mxu0 0
          %853 = vmatprep.subr.bf16.mxu0 0
          %854 = vmatpush2.bf16.msra.mxu0 0
          %855 = vmatprep.subr.bf16.mxu0 0
          %856 = vmatpush2.bf16.msra.mxu0 0
          %857 = vmatprep.mubr.bf16.mxu0 0
          %858 = vmatmul.mubr.bf16.gmra.mxu0 %v757
          %v859 = vpop.f32.mrf.mxu0
          %v860 = vadd.f32 0.0, %v859
          %v861 = vpop.f32.mrf.mxu0
          %v862 = vpop.f32.mrf.mxu0
          %v863 = vadd.f32 0.0, %v862
          %v864 = vpop.f32.mrf.mxu0
          %865 = vmatprep.mubr.bf16.mxu0 0
          %866 = vmatmul.mubr.bf16.gmra.mxu0 %v758
          %v867 = vpop.f32.mrf.mxu0
          %v868 = vadd.f32 0.0, %v867
          %v869 = vpop.f32.mrf.mxu0
          %v870 = vpop.f32.mrf.mxu0
          %v871 = vadd.f32 0.0, %v870
          %v872 = vpop.f32.mrf.mxu0
          %873 = vmatprep.mubr.bf16.mxu0 0
          %874 = vmatmul.mubr.bf16.gmra.mxu0 %v759
          %v875 = vpop.f32.mrf.mxu0
          %v876 = vadd.f32 0.0, %v875
          %v877 = vpop.f32.mrf.mxu0
          %v878 = vpop.f32.mrf.mxu0
          %v879 = vadd.f32 0.0, %v878
          %v880 = vpop.f32.mrf.mxu0
          %881 = vmatprep.mubr.bf16.mxu0 0
          %882 = vmatmul.mubr.bf16.gmra.mxu0 %v760
          %v883 = vpop.f32.mrf.mxu0
          %v884 = vadd.f32 0.0, %v883
          %v885 = vpop.f32.mrf.mxu0
          %v886 = vpop.f32.mrf.mxu0
          %v887 = vadd.f32 0.0, %v886
          %v888 = vpop.f32.mrf.mxu0
          %889 = vdwg.mxu0
          %890 = vst [vmem:[%s714] sm:$0xff] %v860
          %891 = vst [vmem:[%s714 + $0x8] sm:$0xff] %v863
          %892 = vst [vmem:[%s714 + $0x10] sm:$0xff] %v868
          %893 = vst [vmem:[%s714 + $0x18] sm:$0xff] %v871
          %894 = vst [vmem:[%s714 + $0x20] sm:$0xff] %v876
          %895 = vst [vmem:[%s714 + $0x28] sm:$0xff] %v879
          %896 = vst [vmem:[%s714 + $0x30] sm:$0xff] %v884
          %897 = vst [vmem:[%s714 + $0x38] sm:$0xff] %v887
          %v898 = vld [vmem:[#allocation3] sm:$0x1]
          %v899 = vadd.f32 %v860, %v863
          %v900 = vadd.f32 %v899, %v868
          %v901 = vadd.f32 %v900, %v871
          %v902 = vadd.f32 %v901, %v876
          %v903 = vadd.f32 %v902, %v879
          %v904 = vadd.f32 %v903, %v884
          %v905 = vadd.f32 %v904, %v887
          %v906 = vrot.slane %v905, 4
          %v907 = vadd.f32 %v905, %v906
          %v908 = vrot.slane %v907, 2
          %v909 = vadd.f32 %v907, %v908
          %v910 = vrot.slane %v909, 1
          %v911 = vadd.f32 %v909, %v910
          %v912 = vadd.f32 %v898, %v911
          %913 = vst [vmem:[#allocation3] sm:$0x1] %v912
          %v914 = vld [vmem:[#allocation3 + $0x1] sm:$0x1]
          %v915 = vmul.f32 %v860, %v860
          %v916 = vmul.f32 %v863, %v863
          %v917 = vmul.f32 %v868, %v868
          %v918 = vmul.f32 %v871, %v871
          %v919 = vmul.f32 %v876, %v876
          %v920 = vmul.f32 %v879, %v879
          %v921 = vmul.f32 %v884, %v884
          %v922 = vmul.f32 %v887, %v887
          %v923 = vadd.f32 %v915, %v916
          %v924 = vadd.f32 %v923, %v917
          %v925 = vadd.f32 %v924, %v918
          %v926 = vadd.f32 %v925, %v919
          %v927 = vadd.f32 %v926, %v920
          %v928 = vadd.f32 %v927, %v921
          %v929 = vadd.f32 %v928, %v922
          %v930 = vrot.slane %v929, 4
          %v931 = vadd.f32 %v929, %v930
          %v932 = vrot.slane %v931, 2
          %v933 = vadd.f32 %v931, %v932
          %v934 = vrot.slane %v933, 1
          %v935 = vadd.f32 %v933, %v934
          %v936 = vadd.f32 %v914, %v935
          %937 = vst [vmem:[#allocation3 + $0x1] sm:$0x1] %v936
        $region100: #{tpu_custom_call.1} parent=59 // pred_fallthru
          _
        // Predicated region
        $region101: #{tpu_custom_call.1} parent=59 // pred_check
          %p938 = pneg %p473
        $region102: #{tpu_custom_call.1} parent=59 // pred_check_branch
          %940 = sbr.rel (%p938) target = $region104
        $region103: #{tpu_custom_call.1} parent=59 // pred_region
          %s941 = scalar_lea.vmem [#allocation2], %s451
          %v942 = vld [vmem:[%s941] sm:$0xff]
          %v943 = vld [vmem:[%s941 + $0x8] sm:$0xff]
          %v944 = vld [vmem:[%s941 + $0x10] sm:$0xff]
          %v945 = vld [vmem:[%s941 + $0x18] sm:$0xff]
          %v946 = vld [vmem:[%s941 + $0x20] sm:$0xff]
          %v947 = vld [vmem:[%s941 + $0x28] sm:$0xff]
          %v948 = vld [vmem:[%s941 + $0x30] sm:$0xff]
          %v949 = vld [vmem:[%s941 + $0x38] sm:$0xff]
          %v950 = vld [vmem:[#allocation4] sm:$0x1]
          %v951 = vlaneseq
          %v952 = vshrl.u32 %v951, 7
          %v953 = vsub.s32 0, %v952
          %v954 = vrot.slane %v950, %v953
          %v955 = vmul.f32 %v942, %v954
          %v956 = vmul.f32 %v943, %v954
          %v957 = vmul.f32 %v944, %v954
          %v958 = vmul.f32 %v945, %v954
          %v959 = vmul.f32 %v946, %v954
          %v960 = vmul.f32 %v947, %v954
          %v961 = vmul.f32 %v948, %v954
          %v962 = vmul.f32 %v949, %v954
          %v963 = vld [vmem:[#allocation4 + $0x1] sm:$0x1]
          %v964 = vlaneseq
          %v965 = vshrl.u32 %v964, 7
          %v966 = vsub.s32 0, %v965
          %v967 = vrot.slane %v963, %v966
          %v968 = vadd.f32 %v955, %v967
          %v969 = vadd.f32 %v956, %v967
          %v970 = vadd.f32 %v957, %v967
          %v971 = vadd.f32 %v958, %v967
          %v972 = vadd.f32 %v959, %v967
          %v973 = vadd.f32 %v960, %v967
          %v974 = vadd.f32 %v961, %v967
          %v975 = vadd.f32 %v962, %v967
          %v976 = vmax.f32 %v968, 0.0
          %v977 = vmax.f32 %v969, 0.0
          %v978 = vmax.f32 %v970, 0.0
          %v979 = vmax.f32 %v971, 0.0
          %v980 = vmax.f32 %v972, 0.0
          %v981 = vmax.f32 %v973, 0.0
          %v982 = vmax.f32 %v974, 0.0
          %v983 = vmax.f32 %v975, 0.0
          %v984 = vpack.c.bf16 %v977, %v976
          %v985 = vpack.c.bf16 %v979, %v978
          %v986 = vpack.c.bf16 %v981, %v980
          %v987 = vpack.c.bf16 %v983, %v982
          %v988 = vld [vmem:[#allocation11] sm:$0xf]
          %v989 = vld [vmem:[#allocation11 + $0x4] sm:$0xf]
          %v990 = vld [vmem:[#allocation11 + $0x8] sm:$0xf]
          %v991 = vld [vmem:[#allocation11 + $0xc] sm:$0xf]
          %v992 = vld [vmem:[#allocation11 + $0x10] sm:$0xf]
          %v993 = vld [vmem:[#allocation11 + $0x14] sm:$0xf]
          %v994 = vld [vmem:[#allocation11 + $0x18] sm:$0xf]
          %v995 = vld [vmem:[#allocation11 + $0x1c] sm:$0xf]
          %v996 = vld [vmem:[#allocation11 + $0x20] sm:$0xf]
          %v997 = vld [vmem:[#allocation11 + $0x24] sm:$0xf]
          %v998 = vld [vmem:[#allocation11 + $0x28] sm:$0xf]
          %v999 = vld [vmem:[#allocation11 + $0x2c] sm:$0xf]
          %v1000 = vld [vmem:[#allocation11 + $0x30] sm:$0xf]
          %v1001 = vld [vmem:[#allocation11 + $0x34] sm:$0xf]
          %v1002 = vld [vmem:[#allocation11 + $0x38] sm:$0xf]
          %v1003 = vld [vmem:[#allocation11 + $0x3c] sm:$0xf]
          %v1020 = vunpack.c.l.b16 %v988
          %v1021 = vunpack.c.l.b16 %v989
          %v1022 = vunpack.c.l.b16 %v990
          %v1023 = vunpack.c.l.b16 %v991
          %v1024 = vunpack.c.l.b16 %v992
          %v1025 = vunpack.c.l.b16 %v993
          %v1026 = vunpack.c.l.b16 %v994
          %v1027 = vunpack.c.l.b16 %v995
          %v1028 = vunpack.c.l.b16 %v996
          %v1029 = vunpack.c.l.b16 %v997
          %v1030 = vunpack.c.l.b16 %v998
          %v1031 = vunpack.c.l.b16 %v999
          %v1032 = vunpack.c.l.b16 %v1000
          %v1033 = vunpack.c.l.b16 %v1001
          %v1034 = vunpack.c.l.b16 %v1002
          %v1035 = vunpack.c.l.b16 %v1003
          %v1036 = vpack.c.b16 %v1021, %v1020
          %v1037 = vpack.c.b16 %v1023, %v1022
          %v1038 = vpack.c.b16 %v1025, %v1024
          %v1039 = vpack.c.b16 %v1027, %v1026
          %v1040 = vpack.c.b16 %v1029, %v1028
          %v1041 = vpack.c.b16 %v1031, %v1030
          %v1042 = vpack.c.b16 %v1033, %v1032
          %v1043 = vpack.c.b16 %v1035, %v1034
          %1052 = vmatprep.subr.bf16.mxu0 0
          %1053 = vmatpush1.bf16.msra.mxu0 %v1043
          %1054 = vmatprep.subr.bf16.mxu0 0
          %1055 = vmatpush1.bf16.msra.mxu0 %v1042
          %1056 = vmatprep.subr.bf16.mxu0 0
          %1057 = vmatpush1.bf16.msra.mxu0 %v1041
          %1058 = vmatprep.subr.bf16.mxu0 0
          %1059 = vmatpush1.bf16.msra.mxu0 %v1040
          %1060 = vmatprep.subr.bf16.mxu0 0
          %1061 = vmatpush1.bf16.msra.mxu0 %v1039
          %1062 = vmatprep.subr.bf16.mxu0 0
          %1063 = vmatpush1.bf16.msra.mxu0 %v1038
          %1064 = vmatprep.subr.bf16.mxu0 0
          %1065 = vmatpush1.bf16.msra.mxu0 %v1037
          %1066 = vmatprep.subr.bf16.mxu0 0
          %1067 = vmatpush1.bf16.msra.mxu0 %v1036
          %1068 = vmatprep.subr.bf16.mxu0 0
          %1069 = vmatpush2.bf16.msra.mxu0 0
          %1070 = vmatprep.subr.bf16.mxu0 0
          %1071 = vmatpush2.bf16.msra.mxu0 0
          %1072 = vmatprep.subr.bf16.mxu0 0
          %1073 = vmatpush2.bf16.msra.mxu0 0
          %1074 = vmatprep.subr.bf16.mxu0 0
          %1075 = vmatpush2.bf16.msra.mxu0 0
          %1076 = vmatprep.subr.bf16.mxu0 0
          %1077 = vmatpush2.bf16.msra.mxu0 0
          %1078 = vmatprep.subr.bf16.mxu0 0
          %1079 = vmatpush2.bf16.msra.mxu0 0
          %1080 = vmatprep.subr.bf16.mxu0 0
          %1081 = vmatpush2.bf16.msra.mxu0 0
          %1082 = vmatprep.subr.bf16.mxu0 0
          %1083 = vmatpush2.bf16.msra.mxu0 0
          %1084 = vmatprep.mubr.bf16.mxu0 0
          %1085 = vmatmul.mubr.bf16.gmra.mxu0 %v984
          %v1086 = vpop.f32.mrf.mxu0
          %v1087 = vadd.f32 0.0, %v1086
          %v1088 = vpop.f32.mrf.mxu0
          %v1089 = vpop.f32.mrf.mxu0
          %v1090 = vadd.f32 0.0, %v1089
          %v1091 = vpop.f32.mrf.mxu0
          %1092 = vmatprep.mubr.bf16.mxu0 0
          %1093 = vmatmul.mubr.bf16.gmra.mxu0 %v985
          %v1094 = vpop.f32.mrf.mxu0
          %v1095 = vadd.f32 0.0, %v1094
          %v1096 = vpop.f32.mrf.mxu0
          %v1097 = vpop.f32.mrf.mxu0
          %v1098 = vadd.f32 0.0, %v1097
          %v1099 = vpop.f32.mrf.mxu0
          %1100 = vmatprep.mubr.bf16.mxu0 0
          %1101 = vmatmul.mubr.bf16.gmra.mxu0 %v986
          %v1102 = vpop.f32.mrf.mxu0
          %v1103 = vadd.f32 0.0, %v1102
          %v1104 = vpop.f32.mrf.mxu0
          %v1105 = vpop.f32.mrf.mxu0
          %v1106 = vadd.f32 0.0, %v1105
          %v1107 = vpop.f32.mrf.mxu0
          %1108 = vmatprep.mubr.bf16.mxu0 0
          %1109 = vmatmul.mubr.bf16.gmra.mxu0 %v987
          %v1110 = vpop.f32.mrf.mxu0
          %v1111 = vadd.f32 0.0, %v1110
          %v1112 = vpop.f32.mrf.mxu0
          %v1113 = vpop.f32.mrf.mxu0
          %v1114 = vadd.f32 0.0, %v1113
          %v1115 = vpop.f32.mrf.mxu0
          %1116 = vdwg.mxu0
          %1117 = vst [vmem:[%s941] sm:$0xff] %v1087
          %1118 = vst [vmem:[%s941 + $0x8] sm:$0xff] %v1090
          %1119 = vst [vmem:[%s941 + $0x10] sm:$0xff] %v1095
          %1120 = vst [vmem:[%s941 + $0x18] sm:$0xff] %v1098
          %1121 = vst [vmem:[%s941 + $0x20] sm:$0xff] %v1103
          %1122 = vst [vmem:[%s941 + $0x28] sm:$0xff] %v1106
          %1123 = vst [vmem:[%s941 + $0x30] sm:$0xff] %v1111
          %1124 = vst [vmem:[%s941 + $0x38] sm:$0xff] %v1114
          %v1125 = vld [vmem:[#allocation3] sm:$0x1]
          %v1126 = vadd.f32 %v1087, %v1090
          %v1127 = vadd.f32 %v1126, %v1095
          %v1128 = vadd.f32 %v1127, %v1098
          %v1129 = vadd.f32 %v1128, %v1103
          %v1130 = vadd.f32 %v1129, %v1106
          %v1131 = vadd.f32 %v1130, %v1111
          %v1132 = vadd.f32 %v1131, %v1114
          %v1133 = vrot.slane %v1132, 4
          %v1134 = vadd.f32 %v1132, %v1133
          %v1135 = vrot.slane %v1134, 2
          %v1136 = vadd.f32 %v1134, %v1135
          %v1137 = vrot.slane %v1136, 1
          %v1138 = vadd.f32 %v1136, %v1137
          %v1139 = vadd.f32 %v1125, %v1138
          %1140 = vst [vmem:[#allocation3] sm:$0x1] %v1139
          %v1141 = vld [vmem:[#allocation3 + $0x1] sm:$0x1]
          %v1142 = vmul.f32 %v1087, %v1087
          %v1143 = vmul.f32 %v1090, %v1090
          %v1144 = vmul.f32 %v1095, %v1095
          %v1145 = vmul.f32 %v1098, %v1098
          %v1146 = vmul.f32 %v1103, %v1103
          %v1147 = vmul.f32 %v1106, %v1106
          %v1148 = vmul.f32 %v1111, %v1111
          %v1149 = vmul.f32 %v1114, %v1114
          %v1150 = vadd.f32 %v1142, %v1143
          %v1151 = vadd.f32 %v1150, %v1144
          %v1152 = vadd.f32 %v1151, %v1145
          %v1153 = vadd.f32 %v1152, %v1146
          %v1154 = vadd.f32 %v1153, %v1147
          %v1155 = vadd.f32 %v1154, %v1148
          %v1156 = vadd.f32 %v1155, %v1149
          %v1157 = vrot.slane %v1156, 4
          %v1158 = vadd.f32 %v1156, %v1157
          %v1159 = vrot.slane %v1158, 2
          %v1160 = vadd.f32 %v1158, %v1159
          %v1161 = vrot.slane %v1160, 1
          %v1162 = vadd.f32 %v1160, %v1161
          %v1163 = vadd.f32 %v1141, %v1162
          %1164 = vst [vmem:[#allocation3 + $0x1] sm:$0x1] %v1163
        $region104: #{tpu_custom_call.1} parent=59 // pred_fallthru
          _
        // Predicated region
        $region105: #{tpu_custom_call.1} parent=59 // pred_check
          %p1165 = pneg %p493
        $region106: #{tpu_custom_call.1} parent=59 // pred_check_branch
          %1167 = sbr.rel (%p1165) target = $region108
        $region107: #{tpu_custom_call.1} parent=59 // pred_region
          %s1168 = scalar_lea.vmem [#allocation2], %s451
          %v1169 = vld [vmem:[%s1168] sm:$0xff]
          %v1170 = vld [vmem:[%s1168 + $0x8] sm:$0xff]
          %v1171 = vld [vmem:[%s1168 + $0x10] sm:$0xff]
          %v1172 = vld [vmem:[%s1168 + $0x18] sm:$0xff]
          %v1173 = vld [vmem:[%s1168 + $0x20] sm:$0xff]
          %v1174 = vld [vmem:[%s1168 + $0x28] sm:$0xff]
          %v1175 = vld [vmem:[%s1168 + $0x30] sm:$0xff]
          %v1176 = vld [vmem:[%s1168 + $0x38] sm:$0xff]
          %v1177 = vld [vmem:[#allocation4] sm:$0x1]
          %v1178 = vlaneseq
          %v1179 = vshrl.u32 %v1178, 7
          %v1180 = vsub.s32 0, %v1179
          %v1181 = vrot.slane %v1177, %v1180
          %v1182 = vmul.f32 %v1169, %v1181
          %v1183 = vmul.f32 %v1170, %v1181
          %v1184 = vmul.f32 %v1171, %v1181
          %v1185 = vmul.f32 %v1172, %v1181
          %v1186 = vmul.f32 %v1173, %v1181
          %v1187 = vmul.f32 %v1174, %v1181
          %v1188 = vmul.f32 %v1175, %v1181
          %v1189 = vmul.f32 %v1176, %v1181
          %v1190 = vld [vmem:[#allocation4 + $0x1] sm:$0x1]
          %v1191 = vlaneseq
          %v1192 = vshrl.u32 %v1191, 7
          %v1193 = vsub.s32 0, %v1192
          %v1194 = vrot.slane %v1190, %v1193
          %v1195 = vadd.f32 %v1182, %v1194
          %v1196 = vadd.f32 %v1183, %v1194
          %v1197 = vadd.f32 %v1184, %v1194
          %v1198 = vadd.f32 %v1185, %v1194
          %v1199 = vadd.f32 %v1186, %v1194
          %v1200 = vadd.f32 %v1187, %v1194
          %v1201 = vadd.f32 %v1188, %v1194
          %v1202 = vadd.f32 %v1189, %v1194
          %1203 = vst [vmem:[%s443] sm:$0xff] %v1195
          %1204 = vst [vmem:[%s443 + $0x8] sm:$0xff] %v1196
          %1205 = vst [vmem:[%s443 + $0x10] sm:$0xff] %v1197
          %1206 = vst [vmem:[%s443 + $0x18] sm:$0xff] %v1198
          %1207 = vst [vmem:[%s443 + $0x20] sm:$0xff] %v1199
          %1208 = vst [vmem:[%s443 + $0x28] sm:$0xff] %v1200
          %1209 = vst [vmem:[%s443 + $0x30] sm:$0xff] %v1201
          %1210 = vst [vmem:[%s443 + $0x38] sm:$0xff] %v1202
        $region108: #{tpu_custom_call.1} parent=59 // pred_fallthru
          _
        %s1211 = sand.u32 %s272, 1
        %s1212 = scalar_lea.sflag [#allocation7], %s1211
        %s1213 = sand.u32 %s272, 1
        %s1214 = smul.addr %s1213, 64
        %s1215 = scalar_lea.vmem [#allocation13], %s1214
        // Predicated region
        $region109: #{tpu_custom_call.1} parent=59 // pred_check
          %p1216 = pneg %p282
        $region110: #{tpu_custom_call.1} parent=59 // pred_check_branch
          %1218 = sbr.rel (%p1216) target = $region112
        $region111: #{tpu_custom_call.1} parent=59 // pred_region
          %p1219 = scmp.eq.s32.totalorder %s33, 3
          %s1220 = scalar_select %p1219, %s34, 0
          %s1221 = smul.u32 8, %s1220
          %s1223 = ssub.s32 1024, 1024
          %1224 = vsyncadd %s1212, %s1223
          %s1225 = smul.addr %s1221, 128
          %s1226 = scalar_lea.hbm %s10, %s1225
          %s1227 = sshll.u32 %s1215, 4
          %s1228 = int_to_ptr.vmem [resolvable:$true] %s1227
          %1233 = dma.vmem_to_hbm [thread:$0]  %s1228, 1024, %s1226, %s1212, 128, 128, 8
        $region112: #{tpu_custom_call.1} parent=59 // pred_fallthru
          _
      $region60: #{tpu_custom_call.1} parent=5 // pred_fallthru
        _
      %p1234 = scmp.le.s32.totalorder 2, %s24
      // Predicated region
      $region113: #{tpu_custom_call.1} parent=5 // pred_check
        %p1235 = pneg %p1234
      $region114: #{tpu_custom_call.1} parent=5 // pred_check_branch
        %1237 = sbr.rel (%p1235) target = $region116
      $region115: #{tpu_custom_call.1} parent=5 // pred_region
        %s1238 = ssub.s32 %s24, 2
        // Predicated region
        $region117: #{tpu_custom_call.1} parent=115 // pred_check
          %p1239 = pneg %p288
        $region118: #{tpu_custom_call.1} parent=115 // pred_check_branch
          %1241 = sbr.rel (%p1239) target = $region120
        $region119: #{tpu_custom_call.1} parent=115 // pred_region
          %s1242 = sand.u32 %s273, 1
          %s1243 = scalar_lea.sflag [#allocation7], %s1242
          %s1244 = sand.u32 %s273, 1
          %s1245 = smul.addr %s1244, 64
          %s1246 = scalar_lea.vmem [#allocation13], %s1245
          %1247 = dma.done %s1243, 1024
        $region120: #{tpu_custom_call.1} parent=115 // pred_fallthru
          _
      $region116: #{tpu_custom_call.1} parent=5 // pred_fallthru
        _
    $region6: #{tpu_custom_call.1} parent=1 // loop_footer
      %s28 = sadd.s32 1, %s24
    $region7: #{tpu_custom_call.1} parent=1 // loop_footer_branch
      %23 = sbr.rel target = $region3
    $region8: #{tpu_custom_call.1} parent=1 // loop_exit
      _
    %1248 = vsyncpa [#allocation6], 1
    %s1249 = scalar_lea.sflag [#allocation6], 1
    %1250 = vsyncpa %s1249, 1
    %1251 = vsyncpa [#allocation9], 1
    %1252 = vsyncpa [#allocation12], 1
    %1253 = vsyncpa [#allocation7], 1
    %s1254 = scalar_lea.sflag [#allocation7], 1
    %1255 = vsyncpa %s1254, 1

</llo_original>
